<compile_context>
chip_gen: v7x
topology: tpu7x:2x2x1
jax: 0.10.0
libtpu: 0.0.40
codegen_flags: <defaults>
</compile_context>

<pallas_src>
import math

import jax
import jax.numpy as jnp
import numpy as np
from jax import lax
from jax.experimental import pallas as pl
from jax.experimental.pallas import tpu as pltpu


def _pick_tt(B, T, C_in, C_out, HW, itemsize, vmem_budget_bytes=8 << 20):
    """Largest divisor TT of T whose double-buffered in+out blocks fit the VMEM
    budget, preferring choices that leave >= 2 total grid steps (v7x megacore)."""
    divs = [d for d in range(1, T + 1) if T % d == 0]
    fits = [d for d in divs
            if 2 * d * (C_in + C_out) * HW * itemsize <= vmem_budget_bytes]
    if not fits:
        fits = [1]
    pref = [d for d in fits if B * (T // d) >= 2]
    return max(pref) if pref else max(fits)


def make_adaptive_conv(B, T, C_in, C_out, H, W, KH, KW, dtype=jnp.bfloat16):
    OH = H - KH + 1
    OW = W - KW + 1
    HW = H * W
    K = KH * KW * C_in                      # fused contraction depth
    itemsize = jnp.dtype(dtype).itemsize
    TT = _pick_tt(B, T, C_in, C_out, HW, itemsize)
    Tt = T // TT

    def kernel(x_ref, w_ref, o_ref):
        # x_ref: (TT, C_in, HW)   flattened input images (no padding)
        # w_ref: (1, C_out, K)    per-batch weight, rows ordered (kh, kw, c_in)
        # o_ref: (TT, C_out, HW)  full-plane result; wrapper crops to (OH, OW)
        w2 = w_ref[0]                                        # (C_out, K)

        def body(t, carry):
            # f32 copy of the tiny tile for the cross-lane (XLU) work.
            x_t = x_ref[t].astype(jnp.float32)               # (C_in, HW)
            taps = []
            for kh in range(KH):
                for kw in range(KW):
                    s = kh * W + kw
                    # circular roll: wrapped lanes only affect cropped outputs
                    taps.append(x_t if s == 0
                                else pltpu.roll(x_t, HW - s, axis=1))
            slab = jnp.concatenate(taps, axis=0)             # (K, HW) im2col
            # single fused matmul per image (K = KH*KW*C_in), f32 accumulation
            acc = jnp.dot(w2, slab.astype(w2.dtype),
                          preferred_element_type=jnp.float32)
            # TODO(synk): for production C_out/HW, tile HW and/or accumulate in a
            # VMEM scratch instead of a (C_out, HW) register-resident value.
            o_ref[t] = acc.astype(o_ref.dtype)
            return carry

        lax.fori_loop(0, TT, body, 0, unroll=True)

    grid_spec = pltpu.PrefetchScalarGridSpec(
        num_scalar_prefetch=0,
        grid=(B, Tt),                        # t-tiles innermost: weight DMA reused per b
        in_specs=[
            pl.BlockSpec((TT, C_in, HW), lambda b, t: (b * Tt + t, 0, 0)),
            pl.BlockSpec((1, C_out, K), lambda b, t: (b, 0, 0)),
        ],
        out_specs=pl.BlockSpec((TT, C_out, HW), lambda b, t: (b * Tt + t, 0, 0)),
    )

    conv_call = pl.pallas_call(
        kernel,
        out_shape=jax.ShapeDtypeStruct((B * T, C_out, HW), dtype),
        grid_spec=grid_spec,
        compiler_params=pltpu.CompilerParams(
            dimension_semantics=("parallel", "parallel"),
            vmem_limit_bytes=32 * 1024 * 1024),
    )

    def forward(inputs, ada_weight):
        # inputs:     (B*T, C_in, H, W)        NCHW, like the PyTorch module
        # ada_weight: (B, C_out, C_in, KH, KW) per-batch adaptive conv weights
        x_flat = inputs.reshape(B * T, C_in, HW).astype(dtype)    # no pad pass
        # (C_out, C_in, KH, KW) -> (C_out, KH*KW*C_in), rows ordered (kh, kw, c_in)
        # to match the im2col slab row order in the kernel.
        w_r = jnp.transpose(ada_weight, (0, 1, 3, 4, 2)).reshape(
            B, C_out, K).astype(dtype)
        out_full = conv_call(x_flat, w_r)                         # (B*T, C_out, HW)
        # Garbage only lives at oh >= OH or ow >= OW; crop it away.
        # TODO(synk): fuse this crop into the downstream consumer to save one
        # strided-copy HBM pass over the output.
        return out_full.reshape(B * T, C_out, H, W)[:, :, :OH, :OW]

    return forward


if __name__ == "__main__":
    # small shapes consistent with the module's forward contract
    B, T = 2, 8              # weight batch B, inputs.shape[0] == B * T
    C_in, C_out = 4, 8
    H = W = 16
    KH = KW = 3
    dtype = jnp.bfloat16     # bf16 I/O halves HBM traffic; accumulation stays f32

    key = jax.random.PRNGKey(0)
    kx, kw_ = jax.random.split(key)
    x = jax.random.normal(kx, (B * T, C_in, H, W), jnp.float32).astype(dtype)

    # deterministic kaiming-uniform-style init for the adaptive weight
    fan_in = C_in * KH * KW
    bound = 1.0 / math.sqrt(fan_in)
    ada_weight = jax.random.uniform(kw_, (B, C_out, C_in, KH, KW), jnp.float32,
                                    minval=-bound, maxval=bound)

    fwd = make_adaptive_conv(B, T, C_in, C_out, H, W, KH, KW, dtype=dtype)
    out = jax.jit(fwd)(x, ada_weight)
    out = jax.block_until_ready(out)

    # reference: per-batch conv2d on the same bf16-rounded operands, f32 math
    # (kernel_numel > 1, B > 1 branch of the PyTorch module)
    x32 = x.astype(jnp.float32)
    w32 = ada_weight.astype(dtype).astype(jnp.float32)
    refs = []
    for b in range(B):
        refs.append(lax.conv_general_dilated(
            x32[b * T:(b + 1) * T], w32[b],
            window_strides=(1, 1), padding="VALID",
            dimension_numbers=("NCHW", "OIHW", "NCHW"),
            precision=lax.Precision.HIGHEST))
    ref = jnp.concatenate(refs, axis=0)

    assert out.shape == (B * T, C_out, H - KH + 1, W - KW + 1), out.shape
    np.testing.assert_allclose(np.asarray(out.astype(jnp.float32)),
                               np.asarray(ref), atol=2e-2, rtol=2e-2)
    print("KERNEL_OK")
</pallas_src>

<mosaic_0001>
module attributes {stable_mosaic.version = 11 : i64} {
  func.func @kernel(%arg0: i32, %arg1: i32, %arg2: memref<8x4x256xbf16, #tpu.memory_space<vmem>>, %arg3: memref<1x8x36xbf16, #tpu.memory_space<vmem>>, %arg4: memref<8x8x256xbf16, #tpu.memory_space<vmem>>) attributes {dimension_semantics = [#tpu.dimension_semantics<parallel>, #tpu.dimension_semantics<parallel>], iteration_bounds = array<i64: 2, 1>, scalar_prefetch = 0 : i64, scratch_operands = 0 : i64, tpu.core_type = #tpu.core_type<tc>, window_params = [{transform_indices = @transform_0, window_bounds = array<i64: 8, 4, 256>}, {transform_indices = @transform_1, window_bounds = array<i64: 1, 8, 36>}, {transform_indices = @transform_2, window_bounds = array<i64: 8, 8, 256>}]} {
    %c0 = arith.constant 0 : index
    %c0_0 = arith.constant 0 : index
    %c0_1 = arith.constant 0 : index
    %0 = vector.load %arg3[%c0, %c0_0, %c0_1] : memref<1x8x36xbf16, #tpu.memory_space<vmem>>, vector<1x8x36xbf16>
    %1 = vector.shape_cast %0 : vector<1x8x36xbf16> to vector<8x36xbf16>
    %c0_i32 = arith.constant 0 : i32
    %2 = arith.index_cast %c0_i32 : i32 to index
    %c0_2 = arith.constant 0 : index
    %c0_3 = arith.constant 0 : index
    %3 = vector.load %arg2[%2, %c0_2, %c0_3] : memref<8x4x256xbf16, #tpu.memory_space<vmem>>, vector<1x4x256xbf16>
    %4 = vector.shape_cast %3 : vector<1x4x256xbf16> to vector<4x256xbf16>
    %5 = arith.extf %4 : vector<4x256xbf16> to vector<4x256xf32>
    %c255_i32 = arith.constant 255 : i32
    %6 = tpu.dynamic_rotate %5 by %c255_i32 dim 1 : vector<4x256xf32>, i32 -> vector<4x256xf32>
    %c254_i32 = arith.constant 254 : i32
    %7 = tpu.dynamic_rotate %5 by %c254_i32 dim 1 : vector<4x256xf32>, i32 -> vector<4x256xf32>
    %c240_i32 = arith.constant 240 : i32
    %8 = tpu.dynamic_rotate %5 by %c240_i32 dim 1 : vector<4x256xf32>, i32 -> vector<4x256xf32>
    %c239_i32 = arith.constant 239 : i32
    %9 = tpu.dynamic_rotate %5 by %c239_i32 dim 1 : vector<4x256xf32>, i32 -> vector<4x256xf32>
    %c238_i32 = arith.constant 238 : i32
    %10 = tpu.dynamic_rotate %5 by %c238_i32 dim 1 : vector<4x256xf32>, i32 -> vector<4x256xf32>
    %c224_i32 = arith.constant 224 : i32
    %11 = tpu.dynamic_rotate %5 by %c224_i32 dim 1 : vector<4x256xf32>, i32 -> vector<4x256xf32>
    %c223_i32 = arith.constant 223 : i32
    %12 = tpu.dynamic_rotate %5 by %c223_i32 dim 1 : vector<4x256xf32>, i32 -> vector<4x256xf32>
    %c222_i32 = arith.constant 222 : i32
    %13 = tpu.dynamic_rotate %5 by %c222_i32 dim 1 : vector<4x256xf32>, i32 -> vector<4x256xf32>
    %14 = tpu.concatenate %5, %6, %7, %8, %9, %10, %11, %12, %13 in 0 : vector<4x256xf32>, vector<4x256xf32>, vector<4x256xf32>, vector<4x256xf32>, vector<4x256xf32>, vector<4x256xf32>, vector<4x256xf32>, vector<4x256xf32>, vector<4x256xf32> -> vector<36x256xf32>
    %15 = arith.truncf %14 : vector<36x256xf32> to vector<36x256xbf16>
    %cst = arith.constant dense<0.000000e+00> : vector<8x256xf32>
    %16 = tpu.matmul %1, %15, %cst {dimension_numbers = #tpu.dot_dimension_numbers<[1], [0], [0], [1], [0, 0, 1, 1], [], []>} : vector<8x36xbf16>, vector<36x256xbf16>, vector<8x256xf32> -> vector<8x256xf32>
    %17 = arith.truncf %16 : vector<8x256xf32> to vector<8x256xbf16>
    %18 = arith.index_cast %c0_i32 : i32 to index
    %c0_4 = arith.constant 0 : index
    %c0_5 = arith.constant 0 : index
    %19 = vector.load %arg4[%18, %c0_4, %c0_5] : memref<8x8x256xbf16, #tpu.memory_space<vmem>>, vector<1x8x256xbf16>
    %20 = vector.shape_cast %19 : vector<1x8x256xbf16> to vector<8x256xbf16>
    %21 = vector.shape_cast %17 : vector<8x256xbf16> to vector<1x8x256xbf16>
    tpu.vector_store %arg4[%18, %c0_4, %c0_5], %21 {strides = array<i32>} : memref<8x8x256xbf16, #tpu.memory_space<vmem>>, vector<1x8x256xbf16>,
    %c1_i32 = arith.constant 1 : i32
    %22 = arith.index_cast %c1_i32 : i32 to index
    %c0_6 = arith.constant 0 : index
    %c0_7 = arith.constant 0 : index
    %23 = vector.load %arg2[%22, %c0_6, %c0_7] : memref<8x4x256xbf16, #tpu.memory_space<vmem>>, vector<1x4x256xbf16>
    %24 = vector.shape_cast %23 : vector<1x4x256xbf16> to vector<4x256xbf16>
    %25 = arith.extf %24 : vector<4x256xbf16> to vector<4x256xf32>
    %c255_i32_8 = arith.constant 255 : i32
    %26 = tpu.dynamic_rotate %25 by %c255_i32_8 dim 1 : vector<4x256xf32>, i32 -> vector<4x256xf32>
    %c254_i32_9 = arith.constant 254 : i32
    %27 = tpu.dynamic_rotate %25 by %c254_i32_9 dim 1 : vector<4x256xf32>, i32 -> vector<4x256xf32>
    %c240_i32_10 = arith.constant 240 : i32
    %28 = tpu.dynamic_rotate %25 by %c240_i32_10 dim 1 : vector<4x256xf32>, i32 -> vector<4x256xf32>
    %c239_i32_11 = arith.constant 239 : i32
    %29 = tpu.dynamic_rotate %25 by %c239_i32_11 dim 1 : vector<4x256xf32>, i32 -> vector<4x256xf32>
    %c238_i32_12 = arith.constant 238 : i32
    %30 = tpu.dynamic_rotate %25 by %c238_i32_12 dim 1 : vector<4x256xf32>, i32 -> vector<4x256xf32>
    %c224_i32_13 = arith.constant 224 : i32
    %31 = tpu.dynamic_rotate %25 by %c224_i32_13 dim 1 : vector<4x256xf32>, i32 -> vector<4x256xf32>
    %c223_i32_14 = arith.constant 223 : i32
    %32 = tpu.dynamic_rotate %25 by %c223_i32_14 dim 1 : vector<4x256xf32>, i32 -> vector<4x256xf32>
    %c222_i32_15 = arith.constant 222 : i32
    %33 = tpu.dynamic_rotate %25 by %c222_i32_15 dim 1 : vector<4x256xf32>, i32 -> vector<4x256xf32>
    %34 = tpu.concatenate %25, %26, %27, %28, %29, %30, %31, %32, %33 in 0 : vector<4x256xf32>, vector<4x256xf32>, vector<4x256xf32>, vector<4x256xf32>, vector<4x256xf32>, vector<4x256xf32>, vector<4x256xf32>, vector<4x256xf32>, vector<4x256xf32> -> vector<36x256xf32>
    %35 = arith.truncf %34 : vector<36x256xf32> to vector<36x256xbf16>
    %cst_16 = arith.constant dense<0.000000e+00> : vector<8x256xf32>
    %36 = tpu.matmul %1, %35, %cst_16 {dimension_numbers = #tpu.dot_dimension_numbers<[1], [0], [0], [1], [0, 0, 1, 1], [], []>} : vector<8x36xbf16>, vector<36x256xbf16>, vector<8x256xf32> -> vector<8x256xf32>
    %37 = arith.truncf %36 : vector<8x256xf32> to vector<8x256xbf16>
    %38 = arith.index_cast %c1_i32 : i32 to index
    %c0_17 = arith.constant 0 : index
    %c0_18 = arith.constant 0 : index
    %39 = vector.load %arg4[%38, %c0_17, %c0_18] : memref<8x8x256xbf16, #tpu.memory_space<vmem>>, vector<1x8x256xbf16>
    %40 = vector.shape_cast %39 : vector<1x8x256xbf16> to vector<8x256xbf16>
    %41 = vector.shape_cast %37 : vector<8x256xbf16> to vector<1x8x256xbf16>
    tpu.vector_store %arg4[%38, %c0_17, %c0_18], %41 {strides = array<i32>} : memref<8x8x256xbf16, #tpu.memory_space<vmem>>, vector<1x8x256xbf16>,
    %c2_i32 = arith.constant 2 : i32
    %42 = arith.index_cast %c2_i32 : i32 to index
    %c0_19 = arith.constant 0 : index
    %c0_20 = arith.constant 0 : index
    %43 = vector.load %arg2[%42, %c0_19, %c0_20] : memref<8x4x256xbf16, #tpu.memory_space<vmem>>, vector<1x4x256xbf16>
    %44 = vector.shape_cast %43 : vector<1x4x256xbf16> to vector<4x256xbf16>
    %45 = arith.extf %44 : vector<4x256xbf16> to vector<4x256xf32>
    %c255_i32_21 = arith.constant 255 : i32
    %46 = tpu.dynamic_rotate %45 by %c255_i32_21 dim 1 : vector<4x256xf32>, i32 -> vector<4x256xf32>
    %c254_i32_22 = arith.constant 254 : i32
    %47 = tpu.dynamic_rotate %45 by %c254_i32_22 dim 1 : vector<4x256xf32>, i32 -> vector<4x256xf32>
    %c240_i32_23 = arith.constant 240 : i32
    %48 = tpu.dynamic_rotate %45 by %c240_i32_23 dim 1 : vector<4x256xf32>, i32 -> vector<4x256xf32>
    %c239_i32_24 = arith.constant 239 : i32
    %49 = tpu.dynamic_rotate %45 by %c239_i32_24 dim 1 : vector<4x256xf32>, i32 -> vector<4x256xf32>
    %c238_i32_25 = arith.constant 238 : i32
    %50 = tpu.dynamic_rotate %45 by %c238_i32_25 dim 1 : vector<4x256xf32>, i32 -> vector<4x256xf32>
    %c224_i32_26 = arith.constant 224 : i32
    %51 = tpu.dynamic_rotate %45 by %c224_i32_26 dim 1 : vector<4x256xf32>, i32 -> vector<4x256xf32>
    %c223_i32_27 = arith.constant 223 : i32
    %52 = tpu.dynamic_rotate %45 by %c223_i32_27 dim 1 : vector<4x256xf32>, i32 -> vector<4x256xf32>
    %c222_i32_28 = arith.constant 222 : i32
    %53 = tpu.dynamic_rotate %45 by %c222_i32_28 dim 1 : vector<4x256xf32>, i32 -> vector<4x256xf32>
    %54 = tpu.concatenate %45, %46, %47, %48, %49, %50, %51, %52, %53 in 0 : vector<4x256xf32>, vector<4x256xf32>, vector<4x256xf32>, vector<4x256xf32>, vector<4x256xf32>, vector<4x256xf32>, vector<4x256xf32>, vector<4x256xf32>, vector<4x256xf32> -> vector<36x256xf32>
    %55 = arith.truncf %54 : vector<36x256xf32> to vector<36x256xbf16>
    %cst_29 = arith.constant dense<0.000000e+00> : vector<8x256xf32>
    %56 = tpu.matmul %1, %55, %cst_29 {dimension_numbers = #tpu.dot_dimension_numbers<[1], [0], [0], [1], [0, 0, 1, 1], [], []>} : vector<8x36xbf16>, vector<36x256xbf16>, vector<8x256xf32> -> vector<8x256xf32>
    %57 = arith.truncf %56 : vector<8x256xf32> to vector<8x256xbf16>
    %58 = arith.index_cast %c2_i32 : i32 to index
    %c0_30 = arith.constant 0 : index
    %c0_31 = arith.constant 0 : index
    %59 = vector.load %arg4[%58, %c0_30, %c0_31] : memref<8x8x256xbf16, #tpu.memory_space<vmem>>, vector<1x8x256xbf16>
    %60 = vector.shape_cast %59 : vector<1x8x256xbf16> to vector<8x256xbf16>
    %61 = vector.shape_cast %57 : vector<8x256xbf16> to vector<1x8x256xbf16>
    tpu.vector_store %arg4[%58, %c0_30, %c0_31], %61 {strides = array<i32>} : memref<8x8x256xbf16, #tpu.memory_space<vmem>>, vector<1x8x256xbf16>,
    %c3_i32 = arith.constant 3 : i32
    %62 = arith.index_cast %c3_i32 : i32 to index
    %c0_32 = arith.constant 0 : index
    %c0_33 = arith.constant 0 : index
    %63 = vector.load %arg2[%62, %c0_32, %c0_33] : memref<8x4x256xbf16, #tpu.memory_space<vmem>>, vector<1x4x256xbf16>
    %64 = vector.shape_cast %63 : vector<1x4x256xbf16> to vector<4x256xbf16>
    %65 = arith.extf %64 : vector<4x256xbf16> to vector<4x256xf32>
    %c255_i32_34 = arith.constant 255 : i32
    %66 = tpu.dynamic_rotate %65 by %c255_i32_34 dim 1 : vector<4x256xf32>, i32 -> vector<4x256xf32>
    %c254_i32_35 = arith.constant 254 : i32
    %67 = tpu.dynamic_rotate %65 by %c254_i32_35 dim 1 : vector<4x256xf32>, i32 -> vector<4x256xf32>
    %c240_i32_36 = arith.constant 240 : i32
    %68 = tpu.dynamic_rotate %65 by %c240_i32_36 dim 1 : vector<4x256xf32>, i32 -> vector<4x256xf32>
    %c239_i32_37 = arith.constant 239 : i32
    %69 = tpu.dynamic_rotate %65 by %c239_i32_37 dim 1 : vector<4x256xf32>, i32 -> vector<4x256xf32>
    %c238_i32_38 = arith.constant 238 : i32
    %70 = tpu.dynamic_rotate %65 by %c238_i32_38 dim 1 : vector<4x256xf32>, i32 -> vector<4x256xf32>
    %c224_i32_39 = arith.constant 224 : i32
    %71 = tpu.dynamic_rotate %65 by %c224_i32_39 dim 1 : vector<4x256xf32>, i32 -> vector<4x256xf32>
    %c223_i32_40 = arith.constant 223 : i32
    %72 = tpu.dynamic_rotate %65 by %c223_i32_40 dim 1 : vector<4x256xf32>, i32 -> vector<4x256xf32>
    %c222_i32_41 = arith.constant 222 : i32
    %73 = tpu.dynamic_rotate %65 by %c222_i32_41 dim 1 : vector<4x256xf32>, i32 -> vector<4x256xf32>
    %74 = tpu.concatenate %65, %66, %67, %68, %69, %70, %71, %72, %73 in 0 : vector<4x256xf32>, vector<4x256xf32>, vector<4x256xf32>, vector<4x256xf32>, vector<4x256xf32>, vector<4x256xf32>, vector<4x256xf32>, vector<4x256xf32>, vector<4x256xf32> -> vector<36x256xf32>
    %75 = arith.truncf %74 : vector<36x256xf32> to vector<36x256xbf16>
    %cst_42 = arith.constant dense<0.000000e+00> : vector<8x256xf32>
    %76 = tpu.matmul %1, %75, %cst_42 {dimension_numbers = #tpu.dot_dimension_numbers<[1], [0], [0], [1], [0, 0, 1, 1], [], []>} : vector<8x36xbf16>, vector<36x256xbf16>, vector<8x256xf32> -> vector<8x256xf32>
    %77 = arith.truncf %76 : vector<8x256xf32> to vector<8x256xbf16>
    %78 = arith.index_cast %c3_i32 : i32 to index
    %c0_43 = arith.constant 0 : index
    %c0_44 = arith.constant 0 : index
    %79 = vector.load %arg4[%78, %c0_43, %c0_44] : memref<8x8x256xbf16, #tpu.memory_space<vmem>>, vector<1x8x256xbf16>
    %80 = vector.shape_cast %79 : vector<1x8x256xbf16> to vector<8x256xbf16>
    %81 = vector.shape_cast %77 : vector<8x256xbf16> to vector<1x8x256xbf16>
    tpu.vector_store %arg4[%78, %c0_43, %c0_44], %81 {strides = array<i32>} : memref<8x8x256xbf16, #tpu.memory_space<vmem>>, vector<1x8x256xbf16>,
    %c4_i32 = arith.constant 4 : i32
    %82 = arith.index_cast %c4_i32 : i32 to index
    %c0_45 = arith.constant 0 : index
    %c0_46 = arith.constant 0 : index
    %83 = vector.load %arg2[%82, %c0_45, %c0_46] : memref<8x4x256xbf16, #tpu.memory_space<vmem>>, vector<1x4x256xbf16>
    %84 = vector.shape_cast %83 : vector<1x4x256xbf16> to vector<4x256xbf16>
    %85 = arith.extf %84 : vector<4x256xbf16> to vector<4x256xf32>
    %c255_i32_47 = arith.constant 255 : i32
    %86 = tpu.dynamic_rotate %85 by %c255_i32_47 dim 1 : vector<4x256xf32>, i32 -> vector<4x256xf32>
    %c254_i32_48 = arith.constant 254 : i32
    %87 = tpu.dynamic_rotate %85 by %c254_i32_48 dim 1 : vector<4x256xf32>, i32 -> vector<4x256xf32>
    %c240_i32_49 = arith.constant 240 : i32
    %88 = tpu.dynamic_rotate %85 by %c240_i32_49 dim 1 : vector<4x256xf32>, i32 -> vector<4x256xf32>
    %c239_i32_50 = arith.constant 239 : i32
    %89 = tpu.dynamic_rotate %85 by %c239_i32_50 dim 1 : vector<4x256xf32>, i32 -> vector<4x256xf32>
    %c238_i32_51 = arith.constant 238 : i32
    %90 = tpu.dynamic_rotate %85 by %c238_i32_51 dim 1 : vector<4x256xf32>, i32 -> vector<4x256xf32>
    %c224_i32_52 = arith.constant 224 : i32
    %91 = tpu.dynamic_rotate %85 by %c224_i32_52 dim 1 : vector<4x256xf32>, i32 -> vector<4x256xf32>
    %c223_i32_53 = arith.constant 223 : i32
    %92 = tpu.dynamic_rotate %85 by %c223_i32_53 dim 1 : vector<4x256xf32>, i32 -> vector<4x256xf32>
    %c222_i32_54 = arith.constant 222 : i32
    %93 = tpu.dynamic_rotate %85 by %c222_i32_54 dim 1 : vector<4x256xf32>, i32 -> vector<4x256xf32>
    %94 = tpu.concatenate %85, %86, %87, %88, %89, %90, %91, %92, %93 in 0 : vector<4x256xf32>, vector<4x256xf32>, vector<4x256xf32>, vector<4x256xf32>, vector<4x256xf32>, vector<4x256xf32>, vector<4x256xf32>, vector<4x256xf32>, vector<4x256xf32> -> vector<36x256xf32>
    %95 = arith.truncf %94 : vector<36x256xf32> to vector<36x256xbf16>
    %cst_55 = arith.constant dense<0.000000e+00> : vector<8x256xf32>
    %96 = tpu.matmul %1, %95, %cst_55 {dimension_numbers = #tpu.dot_dimension_numbers<[1], [0], [0], [1], [0, 0, 1, 1], [], []>} : vector<8x36xbf16>, vector<36x256xbf16>, vector<8x256xf32> -> vector<8x256xf32>
    %97 = arith.truncf %96 : vector<8x256xf32> to vector<8x256xbf16>
    %98 = arith.index_cast %c4_i32 : i32 to index
    %c0_56 = arith.constant 0 : index
    %c0_57 = arith.constant 0 : index
    %99 = vector.load %arg4[%98, %c0_56, %c0_57] : memref<8x8x256xbf16, #tpu.memory_space<vmem>>, vector<1x8x256xbf16>
    %100 = vector.shape_cast %99 : vector<1x8x256xbf16> to vector<8x256xbf16>
    %101 = vector.shape_cast %97 : vector<8x256xbf16> to vector<1x8x256xbf16>
    tpu.vector_store %arg4[%98, %c0_56, %c0_57], %101 {strides = array<i32>} : memref<8x8x256xbf16, #tpu.memory_space<vmem>>, vector<1x8x256xbf16>,
    %c5_i32 = arith.constant 5 : i32
    %102 = arith.index_cast %c5_i32 : i32 to index
    %c0_58 = arith.constant 0 : index
    %c0_59 = arith.constant 0 : index
    %103 = vector.load %arg2[%102, %c0_58, %c0_59] : memref<8x4x256xbf16, #tpu.memory_space<vmem>>, vector<1x4x256xbf16>
    %104 = vector.shape_cast %103 : vector<1x4x256xbf16> to vector<4x256xbf16>
    %105 = arith.extf %104 : vector<4x256xbf16> to vector<4x256xf32>
    %c255_i32_60 = arith.constant 255 : i32
    %106 = tpu.dynamic_rotate %105 by %c255_i32_60 dim 1 : vector<4x256xf32>, i32 -> vector<4x256xf32>
    %c254_i32_61 = arith.constant 254 : i32
    %107 = tpu.dynamic_rotate %105 by %c254_i32_61 dim 1 : vector<4x256xf32>, i32 -> vector<4x256xf32>
    %c240_i32_62 = arith.constant 240 : i32
    %108 = tpu.dynamic_rotate %105 by %c240_i32_62 dim 1 : vector<4x256xf32>, i32 -> vector<4x256xf32>
    %c239_i32_63 = arith.constant 239 : i32
    %109 = tpu.dynamic_rotate %105 by %c239_i32_63 dim 1 : vector<4x256xf32>, i32 -> vector<4x256xf32>
    %c238_i32_64 = arith.constant 238 : i32
    %110 = tpu.dynamic_rotate %105 by %c238_i32_64 dim 1 : vector<4x256xf32>, i32 -> vector<4x256xf32>
    %c224_i32_65 = arith.constant 224 : i32
    %111 = tpu.dynamic_rotate %105 by %c224_i32_65 dim 1 : vector<4x256xf32>, i32 -> vector<4x256xf32>
    %c223_i32_66 = arith.constant 223 : i32
    %112 = tpu.dynamic_rotate %105 by %c223_i32_66 dim 1 : vector<4x256xf32>, i32 -> vector<4x256xf32>
    %c222_i32_67 = arith.constant 222 : i32
    %113 = tpu.dynamic_rotate %105 by %c222_i32_67 dim 1 : vector<4x256xf32>, i32 -> vector<4x256xf32>
    %114 = tpu.concatenate %105, %106, %107, %108, %109, %110, %111, %112, %113 in 0 : vector<4x256xf32>, vector<4x256xf32>, vector<4x256xf32>, vector<4x256xf32>, vector<4x256xf32>, vector<4x256xf32>, vector<4x256xf32>, vector<4x256xf32>, vector<4x256xf32> -> vector<36x256xf32>
    %115 = arith.truncf %114 : vector<36x256xf32> to vector<36x256xbf16>
    %cst_68 = arith.constant dense<0.000000e+00> : vector<8x256xf32>
    %116 = tpu.matmul %1, %115, %cst_68 {dimension_numbers = #tpu.dot_dimension_numbers<[1], [0], [0], [1], [0, 0, 1, 1], [], []>} : vector<8x36xbf16>, vector<36x256xbf16>, vector<8x256xf32> -> vector<8x256xf32>
    %117 = arith.truncf %116 : vector<8x256xf32> to vector<8x256xbf16>
    %118 = arith.index_cast %c5_i32 : i32 to index
    %c0_69 = arith.constant 0 : index
    %c0_70 = arith.constant 0 : index
    %119 = vector.load %arg4[%118, %c0_69, %c0_70] : memref<8x8x256xbf16, #tpu.memory_space<vmem>>, vector<1x8x256xbf16>
    %120 = vector.shape_cast %119 : vector<1x8x256xbf16> to vector<8x256xbf16>
    %121 = vector.shape_cast %117 : vector<8x256xbf16> to vector<1x8x256xbf16>
    tpu.vector_store %arg4[%118, %c0_69, %c0_70], %121 {strides = array<i32>} : memref<8x8x256xbf16, #tpu.memory_space<vmem>>, vector<1x8x256xbf16>,
    %c6_i32 = arith.constant 6 : i32
    %122 = arith.index_cast %c6_i32 : i32 to index
    %c0_71 = arith.constant 0 : index
    %c0_72 = arith.constant 0 : index
    %123 = vector.load %arg2[%122, %c0_71, %c0_72] : memref<8x4x256xbf16, #tpu.memory_space<vmem>>, vector<1x4x256xbf16>
    %124 = vector.shape_cast %123 : vector<1x4x256xbf16> to vector<4x256xbf16>
    %125 = arith.extf %124 : vector<4x256xbf16> to vector<4x256xf32>
    %c255_i32_73 = arith.constant 255 : i32
    %126 = tpu.dynamic_rotate %125 by %c255_i32_73 dim 1 : vector<4x256xf32>, i32 -> vector<4x256xf32>
    %c254_i32_74 = arith.constant 254 : i32
    %127 = tpu.dynamic_rotate %125 by %c254_i32_74 dim 1 : vector<4x256xf32>, i32 -> vector<4x256xf32>
    %c240_i32_75 = arith.constant 240 : i32
    %128 = tpu.dynamic_rotate %125 by %c240_i32_75 dim 1 : vector<4x256xf32>, i32 -> vector<4x256xf32>
    %c239_i32_76 = arith.constant 239 : i32
    %129 = tpu.dynamic_rotate %125 by %c239_i32_76 dim 1 : vector<4x256xf32>, i32 -> vector<4x256xf32>
    %c238_i32_77 = arith.constant 238 : i32
    %130 = tpu.dynamic_rotate %125 by %c238_i32_77 dim 1 : vector<4x256xf32>, i32 -> vector<4x256xf32>
    %c224_i32_78 = arith.constant 224 : i32
    %131 = tpu.dynamic_rotate %125 by %c224_i32_78 dim 1 : vector<4x256xf32>, i32 -> vector<4x256xf32>
    %c223_i32_79 = arith.constant 223 : i32
    %132 = tpu.dynamic_rotate %125 by %c223_i32_79 dim 1 : vector<4x256xf32>, i32 -> vector<4x256xf32>
    %c222_i32_80 = arith.constant 222 : i32
    %133 = tpu.dynamic_rotate %125 by %c222_i32_80 dim 1 : vector<4x256xf32>, i32 -> vector<4x256xf32>
    %134 = tpu.concatenate %125, %126, %127, %128, %129, %130, %131, %132, %133 in 0 : vector<4x256xf32>, vector<4x256xf32>, vector<4x256xf32>, vector<4x256xf32>, vector<4x256xf32>, vector<4x256xf32>, vector<4x256xf32>, vector<4x256xf32>, vector<4x256xf32> -> vector<36x256xf32>
    %135 = arith.truncf %134 : vector<36x256xf32> to vector<36x256xbf16>
    %cst_81 = arith.constant dense<0.000000e+00> : vector<8x256xf32>
    %136 = tpu.matmul %1, %135, %cst_81 {dimension_numbers = #tpu.dot_dimension_numbers<[1], [0], [0], [1], [0, 0, 1, 1], [], []>} : vector<8x36xbf16>, vector<36x256xbf16>, vector<8x256xf32> -> vector<8x256xf32>
    %137 = arith.truncf %136 : vector<8x256xf32> to vector<8x256xbf16>
    %138 = arith.index_cast %c6_i32 : i32 to index
    %c0_82 = arith.constant 0 : index
    %c0_83 = arith.constant 0 : index
    %139 = vector.load %arg4[%138, %c0_82, %c0_83] : memref<8x8x256xbf16, #tpu.memory_space<vmem>>, vector<1x8x256xbf16>
    %140 = vector.shape_cast %139 : vector<1x8x256xbf16> to vector<8x256xbf16>
    %141 = vector.shape_cast %137 : vector<8x256xbf16> to vector<1x8x256xbf16>
    tpu.vector_store %arg4[%138, %c0_82, %c0_83], %141 {strides = array<i32>} : memref<8x8x256xbf16, #tpu.memory_space<vmem>>, vector<1x8x256xbf16>,
    %c7_i32 = arith.constant 7 : i32
    %142 = arith.index_cast %c7_i32 : i32 to index
    %c0_84 = arith.constant 0 : index
    %c0_85 = arith.constant 0 : index
    %143 = vector.load %arg2[%142, %c0_84, %c0_85] : memref<8x4x256xbf16, #tpu.memory_space<vmem>>, vector<1x4x256xbf16>
    %144 = vector.shape_cast %143 : vector<1x4x256xbf16> to vector<4x256xbf16>
    %145 = arith.extf %144 : vector<4x256xbf16> to vector<4x256xf32>
    %c255_i32_86 = arith.constant 255 : i32
    %146 = tpu.dynamic_rotate %145 by %c255_i32_86 dim 1 : vector<4x256xf32>, i32 -> vector<4x256xf32>
    %c254_i32_87 = arith.constant 254 : i32
    %147 = tpu.dynamic_rotate %145 by %c254_i32_87 dim 1 : vector<4x256xf32>, i32 -> vector<4x256xf32>
    %c240_i32_88 = arith.constant 240 : i32
    %148 = tpu.dynamic_rotate %145 by %c240_i32_88 dim 1 : vector<4x256xf32>, i32 -> vector<4x256xf32>
    %c239_i32_89 = arith.constant 239 : i32
    %149 = tpu.dynamic_rotate %145 by %c239_i32_89 dim 1 : vector<4x256xf32>, i32 -> vector<4x256xf32>
    %c238_i32_90 = arith.constant 238 : i32
    %150 = tpu.dynamic_rotate %145 by %c238_i32_90 dim 1 : vector<4x256xf32>, i32 -> vector<4x256xf32>
    %c224_i32_91 = arith.constant 224 : i32
    %151 = tpu.dynamic_rotate %145 by %c224_i32_91 dim 1 : vector<4x256xf32>, i32 -> vector<4x256xf32>
    %c223_i32_92 = arith.constant 223 : i32
    %152 = tpu.dynamic_rotate %145 by %c223_i32_92 dim 1 : vector<4x256xf32>, i32 -> vector<4x256xf32>
    %c222_i32_93 = arith.constant 222 : i32
    %153 = tpu.dynamic_rotate %145 by %c222_i32_93 dim 1 : vector<4x256xf32>, i32 -> vector<4x256xf32>
    %154 = tpu.concatenate %145, %146, %147, %148, %149, %150, %151, %152, %153 in 0 : vector<4x256xf32>, vector<4x256xf32>, vector<4x256xf32>, vector<4x256xf32>, vector<4x256xf32>, vector<4x256xf32>, vector<4x256xf32>, vector<4x256xf32>, vector<4x256xf32> -> vector<36x256xf32>
    %155 = arith.truncf %154 : vector<36x256xf32> to vector<36x256xbf16>
    %cst_94 = arith.constant dense<0.000000e+00> : vector<8x256xf32>
    %156 = tpu.matmul %1, %155, %cst_94 {dimension_numbers = #tpu.dot_dimension_numbers<[1], [0], [0], [1], [0, 0, 1, 1], [], []>} : vector<8x36xbf16>, vector<36x256xbf16>, vector<8x256xf32> -> vector<8x256xf32>
    %157 = arith.truncf %156 : vector<8x256xf32> to vector<8x256xbf16>
    %158 = arith.index_cast %c7_i32 : i32 to index
    %c0_95 = arith.constant 0 : index
    %c0_96 = arith.constant 0 : index
    %159 = vector.load %arg4[%158, %c0_95, %c0_96] : memref<8x8x256xbf16, #tpu.memory_space<vmem>>, vector<1x8x256xbf16>
    %160 = vector.shape_cast %159 : vector<1x8x256xbf16> to vector<8x256xbf16>
    %161 = vector.shape_cast %157 : vector<8x256xbf16> to vector<1x8x256xbf16>
    tpu.vector_store %arg4[%158, %c0_95, %c0_96], %161 {strides = array<i32>} : memref<8x8x256xbf16, #tpu.memory_space<vmem>>, vector<1x8x256xbf16>,
    %c8_i32 = arith.constant 8 : i32
    return
  }
  func.func @transform_0(%arg0: i32, %arg1: i32) -> (i32, i32, i32) {
    %c1_i32 = arith.constant 1 : i32
    %0 = arith.muli %arg0, %c1_i32 : i32
    %1 = arith.addi %0, %arg1 : i32
    %c0_i32 = arith.constant 0 : i32
    %c0_i32_0 = arith.constant 0 : i32
    %c0_i32_1 = arith.constant 0 : i32
    return %1, %c0_i32, %c0_i32_0 : i32, i32, i32
  }
  func.func @transform_1(%arg0: i32, %arg1: i32) -> (i32, i32, i32) {
    %c0_i32 = arith.constant 0 : i32
    %c0_i32_0 = arith.constant 0 : i32
    %c0_i32_1 = arith.constant 0 : i32
    return %arg0, %c0_i32, %c0_i32_0 : i32, i32, i32
  }
  func.func @transform_2(%arg0: i32, %arg1: i32) -> (i32, i32, i32) {
    %c1_i32 = arith.constant 1 : i32
    %0 = arith.muli %arg0, %c1_i32 : i32
    %1 = arith.addi %0, %arg1 : i32
    %c0_i32 = arith.constant 0 : i32
    %c0_i32_0 = arith.constant 0 : i32
    %c0_i32_1 = arith.constant 0 : i32
    return %1, %c0_i32, %c0_i32_0 : i32, i32, i32
  }
}

</mosaic_0001>

<llo_original>
// kernel: forward.1
$region0: #{forward.1}
  #allocation0 [shape = 'u32[]', space=smem, size = 0x4, offset = 0x4, fixed_abs, tag = 'smem constant byte address 0x4 - core index']
  #allocation1 [shape = 'u32[144,128]{1,0:T(1,128)}', space=vmem, size = 0x12000, scoped, tag = 'internal scratch']
  %s0 = inlined_call_operand.vmem [shape: bf16[16,4,256], index: 0, kind: input, shape index: {}]
  %s1 = inlined_call_operand.vmem [shape: bf16[2,8,36], index: 1, kind: input, shape index: {}]
  %s2 = inlined_call_operand.vmem [shape: bf16[16,8,256], index: 2, kind: output, shape index: {}]
  %s3 = sld [smem:[#allocation0]]
  $region41: #{forward.1} parent=0
    _
  %s5 = ssub.s32 1, %s3
  %s6 = scalar_select 0, %s5, %s3
  loop: start=0, step=1, limit=4
  $region2: #{forward.1} parent=0 // loop_pre_header
    _
  $region3: #{forward.1} parent=0 // loop_header
    %s8 = sphi 0, %s12
    %p9 = scmp.ge.s32.totalorder %s8, 4
    %s15 = sphi 0, %s27
    %s16 = sphi 0, %s23
    %s17 = sphi 0, %s15
    %s18 = sphi 0, %s16
    %s19 = sphi 0, %s17
    %s20 = sphi 0, %s18
    %s32 = sphi 0, %s34
    %s35 = sphi 0, %s32
    %s36 = sphi 0, %s35
    %s52 = sphi 0, %s36
    %s58 = sphi 0, %s60
    %s61 = sphi 0, %s58
    %s62 = sphi 0, %s61
    %s78 = sphi 0, %s62
    %s86 = sphi 0, %s88
    %s89 = sphi 0, %s86
    %s90 = sphi 0, %s89
    %s106 = sphi 0, %s90
  $region4: #{forward.1} parent=0 // loop_header_branch
    %11 = sbr.rel (%p9) target = $region8
  $region5: #{forward.1} parent=0 // loop_body
    %s13 = ssub.s32 %s8, 1
    %s14 = ssub.s32 %s8, 2
    %s21 = sadd.s32 1, %s16
    %p22 = scmp.ge.s32.totalorder %s21, 1
    %s23 = scalar_select %p22, 0, %s21
    %s24 = sadd.s32 1, %s15
    %s25 = scalar_select %p22, %s24, %s15
    %p26 = scmp.ge.s32.totalorder %s25, 2
    %s27 = scalar_select %p26, 0, %s25
    %s28 = sadd.s32 %s15, %s16
    %s29 = sadd.s32 %s27, %s23
    %s30 = ssub.s32 %s28, %s29
    %p31 = scmp.eq.s32.totalorder %s30, 0
    %s33 = sadd.s32 %s32, 1
    %s34 = scalar_select %p31, %s32, %s33
    %p37 = pneg %p31
    %p38 = scmp.eq.s32.totalorder %s8, 1
    %p39 = por %p37, %p38
    %p40 = scmp.ne.s32.totalorder %s32, %s35
    %p41 = scmp.eq.s32.totalorder %s8, 0
    %p42 = por %p40, %p41
    %p43 = scmp.ne.s32.totalorder %s32, %s35
    %p44 = scmp.eq.s32.totalorder %s13, 1
    %p45 = por %p43, %p44
    %p46 = scmp.ne.s32.totalorder %s35, %s36
    %p47 = scmp.eq.s32.totalorder %s13, 0
    %p48 = por %p46, %p47
    %p49 = scmp.ne.s32.totalorder %s35, %s36
    %p50 = scmp.eq.s32.totalorder %s14, 1
    %p51 = por %p49, %p50
    %p53 = scmp.ne.s32.totalorder %s36, %s52
    %p54 = scmp.eq.s32.totalorder %s14, 0
    %p55 = por %p53, %p54
    %s56 = ssub.s32 %s15, %s27
    %p57 = scmp.eq.s32.totalorder %s56, 0
    %s59 = sadd.s32 %s58, 1
    %s60 = scalar_select %p57, %s58, %s59
    %p63 = pneg %p57
    %p64 = scmp.eq.s32.totalorder %s8, 1
    %p65 = por %p63, %p64
    %p66 = scmp.ne.s32.totalorder %s58, %s61
    %p67 = scmp.eq.s32.totalorder %s8, 0
    %p68 = por %p66, %p67
    %p69 = scmp.ne.s32.totalorder %s58, %s61
    %p70 = scmp.eq.s32.totalorder %s13, 1
    %p71 = por %p69, %p70
    %p72 = scmp.ne.s32.totalorder %s61, %s62
    %p73 = scmp.eq.s32.totalorder %s13, 0
    %p74 = por %p72, %p73
    %p75 = scmp.ne.s32.totalorder %s61, %s62
    %p76 = scmp.eq.s32.totalorder %s14, 1
    %p77 = por %p75, %p76
    %p79 = scmp.ne.s32.totalorder %s62, %s78
    %p80 = scmp.eq.s32.totalorder %s14, 0
    %p81 = por %p79, %p80
    %s82 = sadd.s32 %s15, %s16
    %s83 = sadd.s32 %s27, %s23
    %s84 = ssub.s32 %s82, %s83
    %p85 = scmp.eq.s32.totalorder %s84, 0
    %s87 = sadd.s32 %s86, 1
    %s88 = scalar_select %p85, %s86, %s87
    %p91 = pneg %p85
    %p92 = scmp.eq.s32.totalorder %s8, 1
    %p93 = por %p91, %p92
    %p94 = scmp.ne.s32.totalorder %s86, %s89
    %p95 = scmp.eq.s32.totalorder %s8, 0
    %p96 = por %p94, %p95
    %p97 = scmp.ne.s32.totalorder %s86, %s89
    %p98 = scmp.eq.s32.totalorder %s13, 1
    %p99 = por %p97, %p98
    %p100 = scmp.ne.s32.totalorder %s89, %s90
    %p101 = scmp.eq.s32.totalorder %s13, 0
    %p102 = por %p100, %p101
    %p103 = scmp.ne.s32.totalorder %s89, %s90
    %p104 = scmp.eq.s32.totalorder %s14, 1
    %p105 = por %p103, %p104
    %p107 = scmp.ne.s32.totalorder %s90, %s106
    %p108 = scmp.eq.s32.totalorder %s14, 0
    %p109 = por %p107, %p108
    %p110 = scmp.le.s32.totalorder 1, %s8
    %p111 = scmp.lt.s32.totalorder %s8, 3
    %p112 = pnand %p110, %p111
    %p113 = pneg %p112
    // Predicated region
    $region9: #{forward.1} parent=5 // pred_check
      _
    $region10: #{forward.1} parent=5 // pred_check_branch
      %115 = sbr.rel (%p112) target = $region12
    $region11: #{forward.1} parent=5 // pred_region
      %s116 = ssub.s32 %s8, 1
    $region12: #{forward.1} parent=5 // pred_fallthru
      _
    %p117 = scmp.lt.s32.totalorder %s8, 2
    // Predicated region
    $region13: #{forward.1} parent=5 // pred_check
      %p118 = pneg %p117
    $region14: #{forward.1} parent=5 // pred_check_branch
      %120 = sbr.rel (%p118) target = $region16
    $region15: #{forward.1} parent=5 // pred_region
      // Predicated region
      $region17: #{forward.1} parent=15 // pred_check
        %p121 = pneg %p42
      $region18: #{forward.1} parent=15 // pred_check_branch
        %123 = sbr.rel (%p121) target = $region20
      $region19: #{forward.1} parent=15 // pred_region
        %s124 = sadd.s32 %s15, %s16
        %s125 = smul.u32 8, %s124
        %p126 = scmp.lt.s32.totalorder %s125, 15
        %s127 = scalar_select %p126, %s125, 15
        %s128 = smul.addr %s127, 2
        %s129 = smul.addr %s128, 2
        %s130 = scalar_lea.vmem %s0, %s129
        %s131 = sadd.s32 %s15, %s16
        %s132 = smul.u32 8, %s131
      $region20: #{forward.1} parent=15 // pred_fallthru
        _
      // Predicated region
      $region21: #{forward.1} parent=15 // pred_check
        %p133 = pneg %p68
      $region22: #{forward.1} parent=15 // pred_check_branch
        %135 = sbr.rel (%p133) target = $region24
      $region23: #{forward.1} parent=15 // pred_region
        %p136 = scmp.lt.s32.totalorder %s15, 1
        %s137 = scalar_select %p136, %s15, 1
        %s138 = smul.addr %s137, 4
        %s139 = scalar_lea.vmem %s1, %s138
      $region24: #{forward.1} parent=15 // pred_fallthru
        _
    $region16: #{forward.1} parent=5 // pred_fallthru
      _
    %p140 = scmp.le.s32.totalorder 1, %s8
    %p141 = scmp.lt.s32.totalorder %s8, 3
    %p142 = pnand %p140, %p141
    %p143 = pneg %p142
    // Predicated region
    $region25: #{forward.1} parent=5 // pred_check
      _
    $region26: #{forward.1} parent=5 // pred_check_branch
      %145 = sbr.rel (%p142) target = $region28
    $region27: #{forward.1} parent=5 // pred_region
      %s146 = ssub.s32 %s8, 1
      %s147 = sadd.s32 %s17, %s18
      %s148 = smul.u32 8, %s147
      %p149 = scmp.lt.s32.totalorder %s148, 15
      %s150 = scalar_select %p149, %s148, 15
      %s151 = smul.addr %s150, 2
      %s152 = smul.addr %s151, 2
      %s153 = scalar_lea.vmem %s0, %s152
      %p154 = pneg %p48
      %p155 = pneg %p45
      %p156 = scmp.lt.s32.totalorder %s17, 1
      %s157 = scalar_select %p156, %s17, 1
      %s158 = smul.addr %s157, 4
      %s159 = scalar_lea.vmem %s1, %s158
      %p160 = pneg %p74
      %p161 = pneg %p71
      %p162 = pneg %p102
      %p163 = pneg %p99
      %s164 = sadd.s32 %s17, %s18
      %s165 = smul.u32 8, %s164
      %p166 = scmp.lt.s32.totalorder %s165, 15
      %s167 = scalar_select %p166, %s165, 15
      %s168 = smul.addr %s167, 2
      %s169 = smul.addr %s168, 4
      %s170 = scalar_lea.vmem %s2, %s169
      %s171 = sadd.s32 %s17, %s18
      %s172 = smul.u32 8, %s171
      %p173 = scmp.lt.s32.totalorder %s172, 15
      %s174 = scalar_select %p173, %s172, 15
      %s175 = smul.addr %s174, 2
      %s176 = smul.addr %s175, 2
      %s177 = scalar_lea.vmem %s0, %s176
      %s178 = sadd.s32 %s17, %s18
      %s179 = smul.u32 8, %s178
      %p180 = scmp.lt.s32.totalorder %s17, 1
      %s181 = scalar_select %p180, %s17, 1
      %s182 = smul.addr %s181, 4
      %s183 = scalar_lea.vmem %s1, %s182
      %s184 = sadd.s32 %s17, %s18
      %s185 = smul.u32 8, %s184
      %p186 = scmp.lt.s32.totalorder %s185, 15
      %s187 = scalar_select %p186, %s185, 15
      %s188 = smul.addr %s187, 2
      %s189 = smul.addr %s188, 4
      %s190 = scalar_lea.vmem %s2, %s189
      %s191 = sadd.s32 %s17, %s18
      %s192 = smul.u32 8, %s191
      %v194 = vld [vmem:[%s183] sm:$0xf]
      %v195 = vld [vmem:[%s177] sm:$0xf]
      %v196 = vunpack.c.l.bf16 %v195
      %v198 = vcombine.high %v196, %v196
      %200 = vrot.lane.b32.xlu0 %v196, 127
      %v201 = vpop.permute.xlu0 %200
      %202 = vrot.lane.b32.xlu0 %v198, 127
      %v203 = vpop.permute.xlu0 %202
      %v204 = vlaneseq
      %v205 = vand.u32 %v204, 127
      %vm206 = vcmp.lt.s32.totalorder %v205, 127
      %v207 = vsel %vm206, %v201, %v203
      %v208 = vsel %vm206, %v203, %v201
      %209 = vrot.lane.b32.xlu0 %v196, 126
      %v210 = vpop.permute.xlu0 %209
      %211 = vrot.lane.b32.xlu0 %v198, 126
      %v212 = vpop.permute.xlu0 %211
      %vm213 = vcmp.lt.s32.totalorder %v205, 126
      %v214 = vsel %vm213, %v210, %v212
      %v215 = vsel %vm213, %v212, %v210
      %216 = vrot.lane.b32.xlu0 %v196, 112
      %v217 = vpop.permute.xlu0 %216
      %218 = vrot.lane.b32.xlu0 %v198, 112
      %v219 = vpop.permute.xlu0 %218
      %vm220 = vcmp.lt.s32.totalorder %v205, 112
      %v221 = vsel %vm220, %v217, %v219
      %v222 = vsel %vm220, %v219, %v217
      %223 = vrot.lane.b32.xlu0 %v196, 111
      %v224 = vpop.permute.xlu0 %223
      %225 = vrot.lane.b32.xlu0 %v198, 111
      %v226 = vpop.permute.xlu0 %225
      %vm227 = vcmp.lt.s32.totalorder %v205, 111
      %v228 = vsel %vm227, %v224, %v226
      %v229 = vsel %vm227, %v226, %v224
      %230 = vrot.lane.b32.xlu0 %v196, 110
      %v231 = vpop.permute.xlu0 %230
      %232 = vrot.lane.b32.xlu0 %v198, 110
      %v233 = vpop.permute.xlu0 %232
      %vm234 = vcmp.lt.s32.totalorder %v205, 110
      %v235 = vsel %vm234, %v231, %v233
      %v236 = vsel %vm234, %v233, %v231
      %237 = vrot.lane.b32.xlu0 %v196, 96
      %v238 = vpop.permute.xlu0 %237
      %239 = vrot.lane.b32.xlu0 %v198, 96
      %v240 = vpop.permute.xlu0 %239
      %vm241 = vcmp.lt.s32.totalorder %v205, 96
      %v242 = vsel %vm241, %v238, %v240
      %v243 = vsel %vm241, %v240, %v238
      %244 = vrot.lane.b32.xlu0 %v196, 95
      %v245 = vpop.permute.xlu0 %244
      %246 = vrot.lane.b32.xlu0 %v198, 95
      %v247 = vpop.permute.xlu0 %246
      %vm248 = vcmp.lt.s32.totalorder %v205, 95
      %v249 = vsel %vm248, %v245, %v247
      %v250 = vsel %vm248, %v247, %v245
      %251 = vrot.lane.b32.xlu0 %v196, 94
      %v252 = vpop.permute.xlu0 %251
      %253 = vrot.lane.b32.xlu0 %v198, 94
      %v254 = vpop.permute.xlu0 %253
      %vm255 = vcmp.lt.s32.totalorder %v205, 94
      %v256 = vsel %vm255, %v252, %v254
      %v257 = vsel %vm255, %v254, %v252
      %v260 = vrot.slane %v207, 4
      %v261 = vrot.slane %v208, 4
      %v266 = vrot.slane %v221, 4
      %v267 = vrot.slane %v222, 4
      %v272 = vrot.slane %v235, 4
      %v273 = vrot.slane %v236, 4
      %v278 = vrot.slane %v249, 4
      %v279 = vrot.slane %v250, 4
      %vm282 = vcmask 1043456
      %v283 = vsel %vm282, %v196, %v260
      %v284 = vsel %vm282, %v198, %v261
      %v285 = vsel %vm282, %v214, %v266
      %v286 = vsel %vm282, %v215, %v267
      %v287 = vsel %vm282, %v228, %v272
      %v288 = vsel %vm282, %v229, %v273
      %v289 = vsel %vm282, %v242, %v278
      %v290 = vsel %vm282, %v243, %v279
      %v291 = vpack.c.bf16 %v285, %v283
      %v292 = vpack.c.bf16 %v286, %v284
      %v293 = vpack.c.bf16 %v289, %v287
      %v294 = vpack.c.bf16 %v290, %v288
      %v295 = vpack.c.bf16 %v256, %v256
      %v296 = vpack.c.bf16 %v257, %v257
      %vm297 = vcmask 293888
      %v299 = vsel %vm297, %v194, 0
      %vm301 = vcmask 1041408
      %v303 = vsel %vm301, %v295, 0
      %v306 = vsel %vm301, %v296, 0
      %308 = vmatprep.subr.bf16.mxu0 %v292
      %309 = vmatpush1.bf16.msra.mxu0 %v291
      %310 = vmatprep.subr.bf16.mxu0 %v294
      %311 = vmatpush1.bf16.msra.mxu0 %v293
      %312 = vmatprep.subr.bf16.mxu0 %v306
      %313 = vmatpush1.bf16.msra.mxu0 %v303
      %314 = vmatprep.subr.bf16.mxu0 0
      %315 = vmatpush1.bf16.msra.mxu0 0
      %316 = vmatprep.subr.bf16.mxu0 0
      %317 = vmatpush1.bf16.msra.mxu0 0
      %318 = vmatprep.subr.bf16.mxu0 0
      %319 = vmatpush1.bf16.msra.mxu0 0
      %320 = vmatprep.subr.bf16.mxu0 0
      %321 = vmatpush1.bf16.msra.mxu0 0
      %322 = vmatprep.subr.bf16.mxu0 0
      %323 = vmatpush1.bf16.msra.mxu0 0
      %324 = vmatprep.subr.bf16.mxu0 0
      %325 = vmatpush1.bf16.msra.mxu0 0
      %326 = vmatprep.subr.bf16.mxu0 0
      %327 = vmatpush1.bf16.msra.mxu0 0
      %328 = vmatprep.subr.bf16.mxu0 0
      %329 = vmatpush1.bf16.msra.mxu0 0
      %330 = vmatprep.subr.bf16.mxu0 0
      %331 = vmatpush1.bf16.msra.mxu0 0
      %332 = vmatprep.subr.bf16.mxu0 0
      %333 = vmatpush1.bf16.msra.mxu0 0
      %334 = vmatprep.subr.bf16.mxu0 0
      %335 = vmatpush1.bf16.msra.mxu0 0
      %336 = vmatprep.subr.bf16.mxu0 0
      %337 = vmatpush1.bf16.msra.mxu0 0
      %338 = vmatprep.subr.bf16.mxu0 0
      %339 = vmatpush1.bf16.msra.mxu0 0
      %340 = vmatprep.mubr.bf16.mxu0 0
      %341 = vmatmul.mubr.bf16.gmra.mrb[0].mxu0 %v299
      %v342 = vpop.f32.mrb[0].mxu0
      %v343 = vadd.f32 0.0, %v342
      %v344 = vpop.f32.mrb[0].mxu0
      %v345 = vadd.f32 0.0, %v344
      %v346 = vpop.f32.mrb[0].mxu0
      %v347 = vpop.f32.mrb[0].mxu0
      %348 = vdwg.mxu0
      %v349 = vpack.c.bf16 %v343, %v343
      %v350 = vpack.c.bf16 %v345, %v345
      %v353 = vunpack.c.l.b16 %v349
      %v354 = vunpack.c.l.b16 %v350
      %v355 = vpack.c.b16 %v354, %v353
      %357 = vst [vmem:[%s190] sm:$0xff] %v355
      %s358 = scalar_lea.vmem %s177, 4
      %v359 = vld [vmem:[%s358] sm:$0xf]
      %v360 = vunpack.c.l.bf16 %v359
      %v362 = vcombine.high %v360, %v360
      %364 = vrot.lane.b32.xlu0 %v360, 127
      %v365 = vpop.permute.xlu0 %364
      %366 = vrot.lane.b32.xlu0 %v362, 127
      %v367 = vpop.permute.xlu0 %366
      %v368 = vsel %vm206, %v365, %v367
      %v369 = vsel %vm206, %v367, %v365
      %370 = vrot.lane.b32.xlu0 %v360, 126
      %v371 = vpop.permute.xlu0 %370
      %372 = vrot.lane.b32.xlu0 %v362, 126
      %v373 = vpop.permute.xlu0 %372
      %v374 = vsel %vm213, %v371, %v373
      %v375 = vsel %vm213, %v373, %v371
      %376 = vrot.lane.b32.xlu0 %v360, 112
      %v377 = vpop.permute.xlu0 %376
      %378 = vrot.lane.b32.xlu0 %v362, 112
      %v379 = vpop.permute.xlu0 %378
      %v380 = vsel %vm220, %v377, %v379
      %v381 = vsel %vm220, %v379, %v377
      %382 = vrot.lane.b32.xlu0 %v360, 111
      %v383 = vpop.permute.xlu0 %382
      %384 = vrot.lane.b32.xlu0 %v362, 111
      %v385 = vpop.permute.xlu0 %384
      %v386 = vsel %vm227, %v383, %v385
      %v387 = vsel %vm227, %v385, %v383
      %388 = vrot.lane.b32.xlu0 %v360, 110
      %v389 = vpop.permute.xlu0 %388
      %390 = vrot.lane.b32.xlu0 %v362, 110
      %v391 = vpop.permute.xlu0 %390
      %v392 = vsel %vm234, %v389, %v391
      %v393 = vsel %vm234, %v391, %v389
      %394 = vrot.lane.b32.xlu0 %v360, 96
      %v395 = vpop.permute.xlu0 %394
      %396 = vrot.lane.b32.xlu0 %v362, 96
      %v397 = vpop.permute.xlu0 %396
      %v398 = vsel %vm241, %v395, %v397
      %v399 = vsel %vm241, %v397, %v395
      %400 = vrot.lane.b32.xlu0 %v360, 95
      %v401 = vpop.permute.xlu0 %400
      %402 = vrot.lane.b32.xlu0 %v362, 95
      %v403 = vpop.permute.xlu0 %402
      %v404 = vsel %vm248, %v401, %v403
      %v405 = vsel %vm248, %v403, %v401
      %406 = vrot.lane.b32.xlu0 %v360, 94
      %v407 = vpop.permute.xlu0 %406
      %408 = vrot.lane.b32.xlu0 %v362, 94
      %v409 = vpop.permute.xlu0 %408
      %v410 = vsel %vm255, %v407, %v409
      %v411 = vsel %vm255, %v409, %v407
      %v414 = vrot.slane %v368, 4
      %v415 = vrot.slane %v369, 4
      %v420 = vrot.slane %v380, 4
      %v421 = vrot.slane %v381, 4
      %v426 = vrot.slane %v392, 4
      %v427 = vrot.slane %v393, 4
      %v432 = vrot.slane %v404, 4
      %v433 = vrot.slane %v405, 4
      %v436 = vsel %vm282, %v360, %v414
      %v437 = vsel %vm282, %v362, %v415
      %v438 = vsel %vm282, %v374, %v420
      %v439 = vsel %vm282, %v375, %v421
      %v440 = vsel %vm282, %v386, %v426
      %v441 = vsel %vm282, %v387, %v427
      %v442 = vsel %vm282, %v398, %v432
      %v443 = vsel %vm282, %v399, %v433
      %v444 = vpack.c.bf16 %v438, %v436
      %v445 = vpack.c.bf16 %v439, %v437
      %v446 = vpack.c.bf16 %v442, %v440
      %v447 = vpack.c.bf16 %v443, %v441
      %v448 = vpack.c.bf16 %v410, %v410
      %v449 = vpack.c.bf16 %v411, %v411
      %v451 = vsel %vm301, %v448, 0
      %v454 = vsel %vm301, %v449, 0
      %456 = vmatprep.subr.bf16.mxu0 %v445
      %457 = vmatpush1.bf16.msra.mxu0 %v444
      %458 = vmatprep.subr.bf16.mxu0 %v447
      %459 = vmatpush1.bf16.msra.mxu0 %v446
      %460 = vmatprep.subr.bf16.mxu0 %v454
      %461 = vmatpush1.bf16.msra.mxu0 %v451
      %462 = vmatprep.subr.bf16.mxu0 0
      %463 = vmatpush1.bf16.msra.mxu0 0
      %464 = vmatprep.subr.bf16.mxu0 0
      %465 = vmatpush1.bf16.msra.mxu0 0
      %466 = vmatprep.subr.bf16.mxu0 0
      %467 = vmatpush1.bf16.msra.mxu0 0
      %468 = vmatprep.subr.bf16.mxu0 0
      %469 = vmatpush1.bf16.msra.mxu0 0
      %470 = vmatprep.subr.bf16.mxu0 0
      %471 = vmatpush1.bf16.msra.mxu0 0
      %472 = vmatprep.subr.bf16.mxu0 0
      %473 = vmatpush1.bf16.msra.mxu0 0
      %474 = vmatprep.subr.bf16.mxu0 0
      %475 = vmatpush1.bf16.msra.mxu0 0
      %476 = vmatprep.subr.bf16.mxu0 0
      %477 = vmatpush1.bf16.msra.mxu0 0
      %478 = vmatprep.subr.bf16.mxu0 0
      %479 = vmatpush1.bf16.msra.mxu0 0
      %480 = vmatprep.subr.bf16.mxu0 0
      %481 = vmatpush1.bf16.msra.mxu0 0
      %482 = vmatprep.subr.bf16.mxu0 0
      %483 = vmatpush1.bf16.msra.mxu0 0
      %484 = vmatprep.subr.bf16.mxu0 0
      %485 = vmatpush1.bf16.msra.mxu0 0
      %486 = vmatprep.subr.bf16.mxu0 0
      %487 = vmatpush1.bf16.msra.mxu0 0
      %488 = vmatprep.mubr.bf16.mxu0 0
      %489 = vmatmul.mubr.bf16.gmra.mrb[0].mxu0 %v299
      %v490 = vpop.f32.mrb[0].mxu0
      %v491 = vadd.f32 0.0, %v490
      %v492 = vpop.f32.mrb[0].mxu0
      %v493 = vadd.f32 0.0, %v492
      %v494 = vpop.f32.mrb[0].mxu0
      %v495 = vpop.f32.mrb[0].mxu0
      %496 = vdwg.mxu0
      %v497 = vpack.c.bf16 %v491, %v491
      %v498 = vpack.c.bf16 %v493, %v493
      %v501 = vunpack.c.l.b16 %v497
      %v502 = vunpack.c.l.b16 %v498
      %v503 = vpack.c.b16 %v502, %v501
      %s505 = scalar_lea.vmem %s190, 8
      %506 = vst [vmem:[%s505] sm:$0xff] %v503
      %s507 = scalar_lea.vmem %s177, 8
      %v508 = vld [vmem:[%s507] sm:$0xf]
      %v509 = vunpack.c.l.bf16 %v508
      %v511 = vcombine.high %v509, %v509
      %513 = vrot.lane.b32.xlu0 %v509, 127
      %v514 = vpop.permute.xlu0 %513
      %515 = vrot.lane.b32.xlu0 %v511, 127
      %v516 = vpop.permute.xlu0 %515
      %v517 = vsel %vm206, %v514, %v516
      %v518 = vsel %vm206, %v516, %v514
      %519 = vrot.lane.b32.xlu0 %v509, 126
      %v520 = vpop.permute.xlu0 %519
      %521 = vrot.lane.b32.xlu0 %v511, 126
      %v522 = vpop.permute.xlu0 %521
      %v523 = vsel %vm213, %v520, %v522
      %v524 = vsel %vm213, %v522, %v520
      %525 = vrot.lane.b32.xlu0 %v509, 112
      %v526 = vpop.permute.xlu0 %525
      %527 = vrot.lane.b32.xlu0 %v511, 112
      %v528 = vpop.permute.xlu0 %527
      %v529 = vsel %vm220, %v526, %v528
      %v530 = vsel %vm220, %v528, %v526
      %531 = vrot.lane.b32.xlu0 %v509, 111
      %v532 = vpop.permute.xlu0 %531
      %533 = vrot.lane.b32.xlu0 %v511, 111
      %v534 = vpop.permute.xlu0 %533
      %v535 = vsel %vm227, %v532, %v534
      %v536 = vsel %vm227, %v534, %v532
      %537 = vrot.lane.b32.xlu0 %v509, 110
      %v538 = vpop.permute.xlu0 %537
      %539 = vrot.lane.b32.xlu0 %v511, 110
      %v540 = vpop.permute.xlu0 %539
      %v541 = vsel %vm234, %v538, %v540
      %v542 = vsel %vm234, %v540, %v538
      %543 = vrot.lane.b32.xlu0 %v509, 96
      %v544 = vpop.permute.xlu0 %543
      %545 = vrot.lane.b32.xlu0 %v511, 96
      %v546 = vpop.permute.xlu0 %545
      %v547 = vsel %vm241, %v544, %v546
      %v548 = vsel %vm241, %v546, %v544
      %549 = vrot.lane.b32.xlu0 %v509, 95
      %v550 = vpop.permute.xlu0 %549
      %551 = vrot.lane.b32.xlu0 %v511, 95
      %v552 = vpop.permute.xlu0 %551
      %v553 = vsel %vm248, %v550, %v552
      %v554 = vsel %vm248, %v552, %v550
      %555 = vrot.lane.b32.xlu0 %v509, 94
      %v556 = vpop.permute.xlu0 %555
      %557 = vrot.lane.b32.xlu0 %v511, 94
      %v558 = vpop.permute.xlu0 %557
      %v559 = vsel %vm255, %v556, %v558
      %v560 = vsel %vm255, %v558, %v556
      %v563 = vrot.slane %v517, 4
      %v564 = vrot.slane %v518, 4
      %v569 = vrot.slane %v529, 4
      %v570 = vrot.slane %v530, 4
      %v575 = vrot.slane %v541, 4
      %v576 = vrot.slane %v542, 4
      %v581 = vrot.slane %v553, 4
      %v582 = vrot.slane %v554, 4
      %v585 = vsel %vm282, %v509, %v563
      %v586 = vsel %vm282, %v511, %v564
      %v587 = vsel %vm282, %v523, %v569
      %v588 = vsel %vm282, %v524, %v570
      %v589 = vsel %vm282, %v535, %v575
      %v590 = vsel %vm282, %v536, %v576
      %v591 = vsel %vm282, %v547, %v581
      %v592 = vsel %vm282, %v548, %v582
      %v593 = vpack.c.bf16 %v587, %v585
      %v594 = vpack.c.bf16 %v588, %v586
      %v595 = vpack.c.bf16 %v591, %v589
      %v596 = vpack.c.bf16 %v592, %v590
      %v597 = vpack.c.bf16 %v559, %v559
      %v598 = vpack.c.bf16 %v560, %v560
      %v600 = vsel %vm301, %v597, 0
      %v603 = vsel %vm301, %v598, 0
      %605 = vmatprep.subr.bf16.mxu0 %v594
      %606 = vmatpush1.bf16.msra.mxu0 %v593
      %607 = vmatprep.subr.bf16.mxu0 %v596
      %608 = vmatpush1.bf16.msra.mxu0 %v595
      %609 = vmatprep.subr.bf16.mxu0 %v603
      %610 = vmatpush1.bf16.msra.mxu0 %v600
      %611 = vmatprep.subr.bf16.mxu0 0
      %612 = vmatpush1.bf16.msra.mxu0 0
      %613 = vmatprep.subr.bf16.mxu0 0
      %614 = vmatpush1.bf16.msra.mxu0 0
      %615 = vmatprep.subr.bf16.mxu0 0
      %616 = vmatpush1.bf16.msra.mxu0 0
      %617 = vmatprep.subr.bf16.mxu0 0
      %618 = vmatpush1.bf16.msra.mxu0 0
      %619 = vmatprep.subr.bf16.mxu0 0
      %620 = vmatpush1.bf16.msra.mxu0 0
      %621 = vmatprep.subr.bf16.mxu0 0
      %622 = vmatpush1.bf16.msra.mxu0 0
      %623 = vmatprep.subr.bf16.mxu0 0
      %624 = vmatpush1.bf16.msra.mxu0 0
      %625 = vmatprep.subr.bf16.mxu0 0
      %626 = vmatpush1.bf16.msra.mxu0 0
      %627 = vmatprep.subr.bf16.mxu0 0
      %628 = vmatpush1.bf16.msra.mxu0 0
      %629 = vmatprep.subr.bf16.mxu0 0
      %630 = vmatpush1.bf16.msra.mxu0 0
      %631 = vmatprep.subr.bf16.mxu0 0
      %632 = vmatpush1.bf16.msra.mxu0 0
      %633 = vmatprep.subr.bf16.mxu0 0
      %634 = vmatpush1.bf16.msra.mxu0 0
      %635 = vmatprep.subr.bf16.mxu0 0
      %636 = vmatpush1.bf16.msra.mxu0 0
      %637 = vmatprep.mubr.bf16.mxu0 0
      %638 = vmatmul.mubr.bf16.gmra.mrb[0].mxu0 %v299
      %v639 = vpop.f32.mrb[0].mxu0
      %v640 = vadd.f32 0.0, %v639
      %v641 = vpop.f32.mrb[0].mxu0
      %v642 = vadd.f32 0.0, %v641
      %v643 = vpop.f32.mrb[0].mxu0
      %v644 = vpop.f32.mrb[0].mxu0
      %645 = vdwg.mxu0
      %v646 = vpack.c.bf16 %v640, %v640
      %v647 = vpack.c.bf16 %v642, %v642
      %v650 = vunpack.c.l.b16 %v646
      %v651 = vunpack.c.l.b16 %v647
      %v652 = vpack.c.b16 %v651, %v650
      %s654 = scalar_lea.vmem %s190, 16
      %655 = vst [vmem:[%s654] sm:$0xff] %v652
      %s656 = scalar_lea.vmem %s177, 12
      %v657 = vld [vmem:[%s656] sm:$0xf]
      %v658 = vunpack.c.l.bf16 %v657
      %v660 = vcombine.high %v658, %v658
      %662 = vrot.lane.b32.xlu0 %v658, 127
      %v663 = vpop.permute.xlu0 %662
      %664 = vrot.lane.b32.xlu0 %v660, 127
      %v665 = vpop.permute.xlu0 %664
      %v666 = vsel %vm206, %v663, %v665
      %v667 = vsel %vm206, %v665, %v663
      %668 = vrot.lane.b32.xlu0 %v658, 126
      %v669 = vpop.permute.xlu0 %668
      %670 = vrot.lane.b32.xlu0 %v660, 126
      %v671 = vpop.permute.xlu0 %670
      %v672 = vsel %vm213, %v669, %v671
      %v673 = vsel %vm213, %v671, %v669
      %674 = vrot.lane.b32.xlu0 %v658, 112
      %v675 = vpop.permute.xlu0 %674
      %676 = vrot.lane.b32.xlu0 %v660, 112
      %v677 = vpop.permute.xlu0 %676
      %v678 = vsel %vm220, %v675, %v677
      %v679 = vsel %vm220, %v677, %v675
      %680 = vrot.lane.b32.xlu0 %v658, 111
      %v681 = vpop.permute.xlu0 %680
      %682 = vrot.lane.b32.xlu0 %v660, 111
      %v683 = vpop.permute.xlu0 %682
      %v684 = vsel %vm227, %v681, %v683
      %v685 = vsel %vm227, %v683, %v681
      %686 = vrot.lane.b32.xlu0 %v658, 110
      %v687 = vpop.permute.xlu0 %686
      %688 = vrot.lane.b32.xlu0 %v660, 110
      %v689 = vpop.permute.xlu0 %688
      %v690 = vsel %vm234, %v687, %v689
      %v691 = vsel %vm234, %v689, %v687
      %692 = vrot.lane.b32.xlu0 %v658, 96
      %v693 = vpop.permute.xlu0 %692
      %694 = vrot.lane.b32.xlu0 %v660, 96
      %v695 = vpop.permute.xlu0 %694
      %v696 = vsel %vm241, %v693, %v695
      %v697 = vsel %vm241, %v695, %v693
      %698 = vrot.lane.b32.xlu0 %v658, 95
      %v699 = vpop.permute.xlu0 %698
      %700 = vrot.lane.b32.xlu0 %v660, 95
      %v701 = vpop.permute.xlu0 %700
      %v702 = vsel %vm248, %v699, %v701
      %v703 = vsel %vm248, %v701, %v699
      %704 = vrot.lane.b32.xlu0 %v658, 94
      %v705 = vpop.permute.xlu0 %704
      %706 = vrot.lane.b32.xlu0 %v660, 94
      %v707 = vpop.permute.xlu0 %706
      %v708 = vsel %vm255, %v705, %v707
      %v709 = vsel %vm255, %v707, %v705
      %v712 = vrot.slane %v666, 4
      %v713 = vrot.slane %v667, 4
      %v718 = vrot.slane %v678, 4
      %v719 = vrot.slane %v679, 4
      %v724 = vrot.slane %v690, 4
      %v725 = vrot.slane %v691, 4
      %v730 = vrot.slane %v702, 4
      %v731 = vrot.slane %v703, 4
      %v734 = vsel %vm282, %v658, %v712
      %v735 = vsel %vm282, %v660, %v713
      %v736 = vsel %vm282, %v672, %v718
      %v737 = vsel %vm282, %v673, %v719
      %v738 = vsel %vm282, %v684, %v724
      %v739 = vsel %vm282, %v685, %v725
      %v740 = vsel %vm282, %v696, %v730
      %v741 = vsel %vm282, %v697, %v731
      %v742 = vpack.c.bf16 %v736, %v734
      %v743 = vpack.c.bf16 %v737, %v735
      %v744 = vpack.c.bf16 %v740, %v738
      %v745 = vpack.c.bf16 %v741, %v739
      %v746 = vpack.c.bf16 %v708, %v708
      %v747 = vpack.c.bf16 %v709, %v709
      %v749 = vsel %vm301, %v746, 0
      %v752 = vsel %vm301, %v747, 0
      %754 = vmatprep.subr.bf16.mxu0 %v743
      %755 = vmatpush1.bf16.msra.mxu0 %v742
      %756 = vmatprep.subr.bf16.mxu0 %v745
      %757 = vmatpush1.bf16.msra.mxu0 %v744
      %758 = vmatprep.subr.bf16.mxu0 %v752
      %759 = vmatpush1.bf16.msra.mxu0 %v749
      %760 = vmatprep.subr.bf16.mxu0 0
      %761 = vmatpush1.bf16.msra.mxu0 0
      %762 = vmatprep.subr.bf16.mxu0 0
      %763 = vmatpush1.bf16.msra.mxu0 0
      %764 = vmatprep.subr.bf16.mxu0 0
      %765 = vmatpush1.bf16.msra.mxu0 0
      %766 = vmatprep.subr.bf16.mxu0 0
      %767 = vmatpush1.bf16.msra.mxu0 0
      %768 = vmatprep.subr.bf16.mxu0 0
      %769 = vmatpush1.bf16.msra.mxu0 0
      %770 = vmatprep.subr.bf16.mxu0 0
      %771 = vmatpush1.bf16.msra.mxu0 0
      %772 = vmatprep.subr.bf16.mxu0 0
      %773 = vmatpush1.bf16.msra.mxu0 0
      %774 = vmatprep.subr.bf16.mxu0 0
      %775 = vmatpush1.bf16.msra.mxu0 0
      %776 = vmatprep.subr.bf16.mxu0 0
      %777 = vmatpush1.bf16.msra.mxu0 0
      %778 = vmatprep.subr.bf16.mxu0 0
      %779 = vmatpush1.bf16.msra.mxu0 0
      %780 = vmatprep.subr.bf16.mxu0 0
      %781 = vmatpush1.bf16.msra.mxu0 0
      %782 = vmatprep.subr.bf16.mxu0 0
      %783 = vmatpush1.bf16.msra.mxu0 0
      %784 = vmatprep.subr.bf16.mxu0 0
      %785 = vmatpush1.bf16.msra.mxu0 0
      %786 = vmatprep.mubr.bf16.mxu0 0
      %787 = vmatmul.mubr.bf16.gmra.mrb[0].mxu0 %v299
      %v788 = vpop.f32.mrb[0].mxu0
      %v789 = vadd.f32 0.0, %v788
      %v790 = vpop.f32.mrb[0].mxu0
      %v791 = vadd.f32 0.0, %v790
      %v792 = vpop.f32.mrb[0].mxu0
      %v793 = vpop.f32.mrb[0].mxu0
      %794 = vdwg.mxu0
      %v795 = vpack.c.bf16 %v789, %v789
      %v796 = vpack.c.bf16 %v791, %v791
      %v799 = vunpack.c.l.b16 %v795
      %v800 = vunpack.c.l.b16 %v796
      %v801 = vpack.c.b16 %v800, %v799
      %s803 = scalar_lea.vmem %s190, 24
      %804 = vst [vmem:[%s803] sm:$0xff] %v801
      %s805 = scalar_lea.vmem %s177, 16
      %v806 = vld [vmem:[%s805] sm:$0xf]
      %v807 = vunpack.c.l.bf16 %v806
      %v809 = vcombine.high %v807, %v807
      %811 = vrot.lane.b32.xlu0 %v807, 127
      %v812 = vpop.permute.xlu0 %811
      %813 = vrot.lane.b32.xlu0 %v809, 127
      %v814 = vpop.permute.xlu0 %813
      %v815 = vsel %vm206, %v812, %v814
      %v816 = vsel %vm206, %v814, %v812
      %817 = vrot.lane.b32.xlu0 %v807, 126
      %v818 = vpop.permute.xlu0 %817
      %819 = vrot.lane.b32.xlu0 %v809, 126
      %v820 = vpop.permute.xlu0 %819
      %v821 = vsel %vm213, %v818, %v820
      %v822 = vsel %vm213, %v820, %v818
      %823 = vrot.lane.b32.xlu0 %v807, 112
      %v824 = vpop.permute.xlu0 %823
      %825 = vrot.lane.b32.xlu0 %v809, 112
      %v826 = vpop.permute.xlu0 %825
      %v827 = vsel %vm220, %v824, %v826
      %v828 = vsel %vm220, %v826, %v824
      %829 = vrot.lane.b32.xlu0 %v807, 111
      %v830 = vpop.permute.xlu0 %829
      %831 = vrot.lane.b32.xlu0 %v809, 111
      %v832 = vpop.permute.xlu0 %831
      %v833 = vsel %vm227, %v830, %v832
      %v834 = vsel %vm227, %v832, %v830
      %835 = vrot.lane.b32.xlu0 %v807, 110
      %v836 = vpop.permute.xlu0 %835
      %837 = vrot.lane.b32.xlu0 %v809, 110
      %v838 = vpop.permute.xlu0 %837
      %v839 = vsel %vm234, %v836, %v838
      %v840 = vsel %vm234, %v838, %v836
      %841 = vrot.lane.b32.xlu0 %v807, 96
      %v842 = vpop.permute.xlu0 %841
      %843 = vrot.lane.b32.xlu0 %v809, 96
      %v844 = vpop.permute.xlu0 %843
      %v845 = vsel %vm241, %v842, %v844
      %v846 = vsel %vm241, %v844, %v842
      %847 = vrot.lane.b32.xlu0 %v807, 95
      %v848 = vpop.permute.xlu0 %847
      %849 = vrot.lane.b32.xlu0 %v809, 95
      %v850 = vpop.permute.xlu0 %849
      %v851 = vsel %vm248, %v848, %v850
      %v852 = vsel %vm248, %v850, %v848
      %853 = vrot.lane.b32.xlu0 %v807, 94
      %v854 = vpop.permute.xlu0 %853
      %855 = vrot.lane.b32.xlu0 %v809, 94
      %v856 = vpop.permute.xlu0 %855
      %v857 = vsel %vm255, %v854, %v856
      %v858 = vsel %vm255, %v856, %v854
      %v861 = vrot.slane %v815, 4
      %v862 = vrot.slane %v816, 4
      %v867 = vrot.slane %v827, 4
      %v868 = vrot.slane %v828, 4
      %v873 = vrot.slane %v839, 4
      %v874 = vrot.slane %v840, 4
      %v879 = vrot.slane %v851, 4
      %v880 = vrot.slane %v852, 4
      %v883 = vsel %vm282, %v807, %v861
      %v884 = vsel %vm282, %v809, %v862
      %v885 = vsel %vm282, %v821, %v867
      %v886 = vsel %vm282, %v822, %v868
      %v887 = vsel %vm282, %v833, %v873
      %v888 = vsel %vm282, %v834, %v874
      %v889 = vsel %vm282, %v845, %v879
      %v890 = vsel %vm282, %v846, %v880
      %v891 = vpack.c.bf16 %v885, %v883
      %v892 = vpack.c.bf16 %v886, %v884
      %v893 = vpack.c.bf16 %v889, %v887
      %v894 = vpack.c.bf16 %v890, %v888
      %v895 = vpack.c.bf16 %v857, %v857
      %v896 = vpack.c.bf16 %v858, %v858
      %v898 = vsel %vm301, %v895, 0
      %v901 = vsel %vm301, %v896, 0
      %903 = vmatprep.subr.bf16.mxu0 %v892
      %904 = vmatpush1.bf16.msra.mxu0 %v891
      %905 = vmatprep.subr.bf16.mxu0 %v894
      %906 = vmatpush1.bf16.msra.mxu0 %v893
      %907 = vmatprep.subr.bf16.mxu0 %v901
      %908 = vmatpush1.bf16.msra.mxu0 %v898
      %909 = vmatprep.subr.bf16.mxu0 0
      %910 = vmatpush1.bf16.msra.mxu0 0
      %911 = vmatprep.subr.bf16.mxu0 0
      %912 = vmatpush1.bf16.msra.mxu0 0
      %913 = vmatprep.subr.bf16.mxu0 0
      %914 = vmatpush1.bf16.msra.mxu0 0
      %915 = vmatprep.subr.bf16.mxu0 0
      %916 = vmatpush1.bf16.msra.mxu0 0
      %917 = vmatprep.subr.bf16.mxu0 0
      %918 = vmatpush1.bf16.msra.mxu0 0
      %919 = vmatprep.subr.bf16.mxu0 0
      %920 = vmatpush1.bf16.msra.mxu0 0
      %921 = vmatprep.subr.bf16.mxu0 0
      %922 = vmatpush1.bf16.msra.mxu0 0
      %923 = vmatprep.subr.bf16.mxu0 0
      %924 = vmatpush1.bf16.msra.mxu0 0
      %925 = vmatprep.subr.bf16.mxu0 0
      %926 = vmatpush1.bf16.msra.mxu0 0
      %927 = vmatprep.subr.bf16.mxu0 0
      %928 = vmatpush1.bf16.msra.mxu0 0
      %929 = vmatprep.subr.bf16.mxu0 0
      %930 = vmatpush1.bf16.msra.mxu0 0
      %931 = vmatprep.subr.bf16.mxu0 0
      %932 = vmatpush1.bf16.msra.mxu0 0
      %933 = vmatprep.subr.bf16.mxu0 0
      %934 = vmatpush1.bf16.msra.mxu0 0
      %935 = vmatprep.mubr.bf16.mxu0 0
      %936 = vmatmul.mubr.bf16.gmra.mrb[0].mxu0 %v299
      %v937 = vpop.f32.mrb[0].mxu0
      %v938 = vadd.f32 0.0, %v937
      %v939 = vpop.f32.mrb[0].mxu0
      %v940 = vadd.f32 0.0, %v939
      %v941 = vpop.f32.mrb[0].mxu0
      %v942 = vpop.f32.mrb[0].mxu0
      %943 = vdwg.mxu0
      %v944 = vpack.c.bf16 %v938, %v938
      %v945 = vpack.c.bf16 %v940, %v940
      %v948 = vunpack.c.l.b16 %v944
      %v949 = vunpack.c.l.b16 %v945
      %v950 = vpack.c.b16 %v949, %v948
      %s952 = scalar_lea.vmem %s190, 32
      %953 = vst [vmem:[%s952] sm:$0xff] %v950
      %s954 = scalar_lea.vmem %s177, 20
      %v955 = vld [vmem:[%s954] sm:$0xf]
      %v956 = vunpack.c.l.bf16 %v955
      %v958 = vcombine.high %v956, %v956
      %960 = vrot.lane.b32.xlu0 %v956, 127
      %v961 = vpop.permute.xlu0 %960
      %962 = vrot.lane.b32.xlu0 %v958, 127
      %v963 = vpop.permute.xlu0 %962
      %v964 = vsel %vm206, %v961, %v963
      %v965 = vsel %vm206, %v963, %v961
      %966 = vrot.lane.b32.xlu0 %v956, 126
      %v967 = vpop.permute.xlu0 %966
      %968 = vrot.lane.b32.xlu0 %v958, 126
      %v969 = vpop.permute.xlu0 %968
      %v970 = vsel %vm213, %v967, %v969
      %v971 = vsel %vm213, %v969, %v967
      %972 = vrot.lane.b32.xlu0 %v956, 112
      %v973 = vpop.permute.xlu0 %972
      %974 = vrot.lane.b32.xlu0 %v958, 112
      %v975 = vpop.permute.xlu0 %974
      %v976 = vsel %vm220, %v973, %v975
      %v977 = vsel %vm220, %v975, %v973
      %978 = vrot.lane.b32.xlu0 %v956, 111
      %v979 = vpop.permute.xlu0 %978
      %980 = vrot.lane.b32.xlu0 %v958, 111
      %v981 = vpop.permute.xlu0 %980
      %v982 = vsel %vm227, %v979, %v981
      %v983 = vsel %vm227, %v981, %v979
      %984 = vrot.lane.b32.xlu0 %v956, 110
      %v985 = vpop.permute.xlu0 %984
      %986 = vrot.lane.b32.xlu0 %v958, 110
      %v987 = vpop.permute.xlu0 %986
      %v988 = vsel %vm234, %v985, %v987
      %v989 = vsel %vm234, %v987, %v985
      %990 = vrot.lane.b32.xlu0 %v956, 96
      %v991 = vpop.permute.xlu0 %990
      %992 = vrot.lane.b32.xlu0 %v958, 96
      %v993 = vpop.permute.xlu0 %992
      %v994 = vsel %vm241, %v991, %v993
      %v995 = vsel %vm241, %v993, %v991
      %996 = vrot.lane.b32.xlu0 %v956, 95
      %v997 = vpop.permute.xlu0 %996
      %998 = vrot.lane.b32.xlu0 %v958, 95
      %v999 = vpop.permute.xlu0 %998
      %v1000 = vsel %vm248, %v997, %v999
      %v1001 = vsel %vm248, %v999, %v997
      %1002 = vrot.lane.b32.xlu0 %v956, 94
      %v1003 = vpop.permute.xlu0 %1002
      %1004 = vrot.lane.b32.xlu0 %v958, 94
      %v1005 = vpop.permute.xlu0 %1004
      %v1006 = vsel %vm255, %v1003, %v1005
      %v1007 = vsel %vm255, %v1005, %v1003
      %v1010 = vrot.slane %v964, 4
      %v1011 = vrot.slane %v965, 4
      %v1016 = vrot.slane %v976, 4
      %v1017 = vrot.slane %v977, 4
      %v1022 = vrot.slane %v988, 4
      %v1023 = vrot.slane %v989, 4
      %v1028 = vrot.slane %v1000, 4
      %v1029 = vrot.slane %v1001, 4
      %v1032 = vsel %vm282, %v956, %v1010
      %v1033 = vsel %vm282, %v958, %v1011
      %v1034 = vsel %vm282, %v970, %v1016
      %v1035 = vsel %vm282, %v971, %v1017
      %v1036 = vsel %vm282, %v982, %v1022
      %v1037 = vsel %vm282, %v983, %v1023
      %v1038 = vsel %vm282, %v994, %v1028
      %v1039 = vsel %vm282, %v995, %v1029
      %v1040 = vpack.c.bf16 %v1034, %v1032
      %v1041 = vpack.c.bf16 %v1035, %v1033
      %v1042 = vpack.c.bf16 %v1038, %v1036
      %v1043 = vpack.c.bf16 %v1039, %v1037
      %v1044 = vpack.c.bf16 %v1006, %v1006
      %v1045 = vpack.c.bf16 %v1007, %v1007
      %v1047 = vsel %vm301, %v1044, 0
      %v1050 = vsel %vm301, %v1045, 0
      %1052 = vmatprep.subr.bf16.mxu0 %v1041
      %1053 = vmatpush1.bf16.msra.mxu0 %v1040
      %1054 = vmatprep.subr.bf16.mxu0 %v1043
      %1055 = vmatpush1.bf16.msra.mxu0 %v1042
      %1056 = vmatprep.subr.bf16.mxu0 %v1050
      %1057 = vmatpush1.bf16.msra.mxu0 %v1047
      %1058 = vmatprep.subr.bf16.mxu0 0
      %1059 = vmatpush1.bf16.msra.mxu0 0
      %1060 = vmatprep.subr.bf16.mxu0 0
      %1061 = vmatpush1.bf16.msra.mxu0 0
      %1062 = vmatprep.subr.bf16.mxu0 0
      %1063 = vmatpush1.bf16.msra.mxu0 0
      %1064 = vmatprep.subr.bf16.mxu0 0
      %1065 = vmatpush1.bf16.msra.mxu0 0
      %1066 = vmatprep.subr.bf16.mxu0 0
      %1067 = vmatpush1.bf16.msra.mxu0 0
      %1068 = vmatprep.subr.bf16.mxu0 0
      %1069 = vmatpush1.bf16.msra.mxu0 0
      %1070 = vmatprep.subr.bf16.mxu0 0
      %1071 = vmatpush1.bf16.msra.mxu0 0
      %1072 = vmatprep.subr.bf16.mxu0 0
      %1073 = vmatpush1.bf16.msra.mxu0 0
      %1074 = vmatprep.subr.bf16.mxu0 0
      %1075 = vmatpush1.bf16.msra.mxu0 0
      %1076 = vmatprep.subr.bf16.mxu0 0
      %1077 = vmatpush1.bf16.msra.mxu0 0
      %1078 = vmatprep.subr.bf16.mxu0 0
      %1079 = vmatpush1.bf16.msra.mxu0 0
      %1080 = vmatprep.subr.bf16.mxu0 0
      %1081 = vmatpush1.bf16.msra.mxu0 0
      %1082 = vmatprep.subr.bf16.mxu0 0
      %1083 = vmatpush1.bf16.msra.mxu0 0
      %1084 = vmatprep.mubr.bf16.mxu0 0
      %1085 = vmatmul.mubr.bf16.gmra.mrb[0].mxu0 %v299
      %v1086 = vpop.f32.mrb[0].mxu0
      %v1087 = vadd.f32 0.0, %v1086
      %v1088 = vpop.f32.mrb[0].mxu0
      %v1089 = vadd.f32 0.0, %v1088
      %v1090 = vpop.f32.mrb[0].mxu0
      %v1091 = vpop.f32.mrb[0].mxu0
      %1092 = vdwg.mxu0
      %v1093 = vpack.c.bf16 %v1087, %v1087
      %v1094 = vpack.c.bf16 %v1089, %v1089
      %v1097 = vunpack.c.l.b16 %v1093
      %v1098 = vunpack.c.l.b16 %v1094
      %v1099 = vpack.c.b16 %v1098, %v1097
      %s1101 = scalar_lea.vmem %s190, 40
      %1102 = vst [vmem:[%s1101] sm:$0xff] %v1099
      %s1103 = scalar_lea.vmem %s177, 24
      %v1104 = vld [vmem:[%s1103] sm:$0xf]
      %v1105 = vunpack.c.l.bf16 %v1104
      %v1107 = vcombine.high %v1105, %v1105
      %1109 = vrot.lane.b32.xlu0 %v1105, 127
      %v1110 = vpop.permute.xlu0 %1109
      %1111 = vrot.lane.b32.xlu0 %v1107, 127
      %v1112 = vpop.permute.xlu0 %1111
      %v1113 = vsel %vm206, %v1110, %v1112
      %v1114 = vsel %vm206, %v1112, %v1110
      %1115 = vrot.lane.b32.xlu0 %v1105, 126
      %v1116 = vpop.permute.xlu0 %1115
      %1117 = vrot.lane.b32.xlu0 %v1107, 126
      %v1118 = vpop.permute.xlu0 %1117
      %v1119 = vsel %vm213, %v1116, %v1118
      %v1120 = vsel %vm213, %v1118, %v1116
      %1121 = vrot.lane.b32.xlu0 %v1105, 112
      %v1122 = vpop.permute.xlu0 %1121
      %1123 = vrot.lane.b32.xlu0 %v1107, 112
      %v1124 = vpop.permute.xlu0 %1123
      %v1125 = vsel %vm220, %v1122, %v1124
      %v1126 = vsel %vm220, %v1124, %v1122
      %1127 = vrot.lane.b32.xlu0 %v1105, 111
      %v1128 = vpop.permute.xlu0 %1127
      %1129 = vrot.lane.b32.xlu0 %v1107, 111
      %v1130 = vpop.permute.xlu0 %1129
      %v1131 = vsel %vm227, %v1128, %v1130
      %v1132 = vsel %vm227, %v1130, %v1128
      %1133 = vrot.lane.b32.xlu0 %v1105, 110
      %v1134 = vpop.permute.xlu0 %1133
      %1135 = vrot.lane.b32.xlu0 %v1107, 110
      %v1136 = vpop.permute.xlu0 %1135
      %v1137 = vsel %vm234, %v1134, %v1136
      %v1138 = vsel %vm234, %v1136, %v1134
      %1139 = vrot.lane.b32.xlu0 %v1105, 96
      %v1140 = vpop.permute.xlu0 %1139
      %1141 = vrot.lane.b32.xlu0 %v1107, 96
      %v1142 = vpop.permute.xlu0 %1141
      %v1143 = vsel %vm241, %v1140, %v1142
      %v1144 = vsel %vm241, %v1142, %v1140
      %1145 = vrot.lane.b32.xlu0 %v1105, 95
      %v1146 = vpop.permute.xlu0 %1145
      %1147 = vrot.lane.b32.xlu0 %v1107, 95
      %v1148 = vpop.permute.xlu0 %1147
      %v1149 = vsel %vm248, %v1146, %v1148
      %v1150 = vsel %vm248, %v1148, %v1146
      %1151 = vrot.lane.b32.xlu0 %v1105, 94
      %v1152 = vpop.permute.xlu0 %1151
      %1153 = vrot.lane.b32.xlu0 %v1107, 94
      %v1154 = vpop.permute.xlu0 %1153
      %v1155 = vsel %vm255, %v1152, %v1154
      %v1156 = vsel %vm255, %v1154, %v1152
      %v1159 = vrot.slane %v1113, 4
      %v1160 = vrot.slane %v1114, 4
      %v1165 = vrot.slane %v1125, 4
      %v1166 = vrot.slane %v1126, 4
      %v1171 = vrot.slane %v1137, 4
      %v1172 = vrot.slane %v1138, 4
      %v1177 = vrot.slane %v1149, 4
      %v1178 = vrot.slane %v1150, 4
      %v1181 = vsel %vm282, %v1105, %v1159
      %v1182 = vsel %vm282, %v1107, %v1160
      %v1183 = vsel %vm282, %v1119, %v1165
      %v1184 = vsel %vm282, %v1120, %v1166
      %v1185 = vsel %vm282, %v1131, %v1171
      %v1186 = vsel %vm282, %v1132, %v1172
      %v1187 = vsel %vm282, %v1143, %v1177
      %v1188 = vsel %vm282, %v1144, %v1178
      %v1189 = vpack.c.bf16 %v1183, %v1181
      %v1190 = vpack.c.bf16 %v1184, %v1182
      %v1191 = vpack.c.bf16 %v1187, %v1185
      %v1192 = vpack.c.bf16 %v1188, %v1186
      %v1193 = vpack.c.bf16 %v1155, %v1155
      %v1194 = vpack.c.bf16 %v1156, %v1156
      %v1196 = vsel %vm301, %v1193, 0
      %v1199 = vsel %vm301, %v1194, 0
      %1201 = vmatprep.subr.bf16.mxu0 %v1190
      %1202 = vmatpush1.bf16.msra.mxu0 %v1189
      %1203 = vmatprep.subr.bf16.mxu0 %v1192
      %1204 = vmatpush1.bf16.msra.mxu0 %v1191
      %1205 = vmatprep.subr.bf16.mxu0 %v1199
      %1206 = vmatpush1.bf16.msra.mxu0 %v1196
      %1207 = vmatprep.subr.bf16.mxu0 0
      %1208 = vmatpush1.bf16.msra.mxu0 0
      %1209 = vmatprep.subr.bf16.mxu0 0
      %1210 = vmatpush1.bf16.msra.mxu0 0
      %1211 = vmatprep.subr.bf16.mxu0 0
      %1212 = vmatpush1.bf16.msra.mxu0 0
      %1213 = vmatprep.subr.bf16.mxu0 0
      %1214 = vmatpush1.bf16.msra.mxu0 0
      %1215 = vmatprep.subr.bf16.mxu0 0
      %1216 = vmatpush1.bf16.msra.mxu0 0
      %1217 = vmatprep.subr.bf16.mxu0 0
      %1218 = vmatpush1.bf16.msra.mxu0 0
      %1219 = vmatprep.subr.bf16.mxu0 0
      %1220 = vmatpush1.bf16.msra.mxu0 0
      %1221 = vmatprep.subr.bf16.mxu0 0
      %1222 = vmatpush1.bf16.msra.mxu0 0
      %1223 = vmatprep.subr.bf16.mxu0 0
      %1224 = vmatpush1.bf16.msra.mxu0 0
      %1225 = vmatprep.subr.bf16.mxu0 0
      %1226 = vmatpush1.bf16.msra.mxu0 0
      %1227 = vmatprep.subr.bf16.mxu0 0
      %1228 = vmatpush1.bf16.msra.mxu0 0
      %1229 = vmatprep.subr.bf16.mxu0 0
      %1230 = vmatpush1.bf16.msra.mxu0 0
      %1231 = vmatprep.subr.bf16.mxu0 0
      %1232 = vmatpush1.bf16.msra.mxu0 0
      %1233 = vmatprep.mubr.bf16.mxu0 0
      %1234 = vmatmul.mubr.bf16.gmra.mrb[0].mxu0 %v299
      %v1235 = vpop.f32.mrb[0].mxu0
      %v1236 = vadd.f32 0.0, %v1235
      %v1237 = vpop.f32.mrb[0].mxu0
      %v1238 = vadd.f32 0.0, %v1237
      %v1239 = vpop.f32.mrb[0].mxu0
      %v1240 = vpop.f32.mrb[0].mxu0
      %1241 = vdwg.mxu0
      %v1242 = vpack.c.bf16 %v1236, %v1236
      %v1243 = vpack.c.bf16 %v1238, %v1238
      %v1246 = vunpack.c.l.b16 %v1242
      %v1247 = vunpack.c.l.b16 %v1243
      %v1248 = vpack.c.b16 %v1247, %v1246
      %s1250 = scalar_lea.vmem %s190, 48
      %1251 = vst [vmem:[%s1250] sm:$0xff] %v1248
      %s1252 = scalar_lea.vmem %s177, 28
      %v1253 = vld [vmem:[%s1252] sm:$0xf]
      %v1254 = vunpack.c.l.bf16 %v1253
      %v1256 = vcombine.high %v1254, %v1254
      %1258 = vrot.lane.b32.xlu0 %v1254, 127
      %v1259 = vpop.permute.xlu0 %1258
      %1260 = vrot.lane.b32.xlu0 %v1256, 127
      %v1261 = vpop.permute.xlu0 %1260
      %v1262 = vsel %vm206, %v1259, %v1261
      %v1263 = vsel %vm206, %v1261, %v1259
      %1264 = vrot.lane.b32.xlu0 %v1254, 126
      %v1265 = vpop.permute.xlu0 %1264
      %1266 = vrot.lane.b32.xlu0 %v1256, 126
      %v1267 = vpop.permute.xlu0 %1266
      %v1268 = vsel %vm213, %v1265, %v1267
      %v1269 = vsel %vm213, %v1267, %v1265
      %1270 = vrot.lane.b32.xlu0 %v1254, 112
      %v1271 = vpop.permute.xlu0 %1270
      %1272 = vrot.lane.b32.xlu0 %v1256, 112
      %v1273 = vpop.permute.xlu0 %1272
      %v1274 = vsel %vm220, %v1271, %v1273
      %v1275 = vsel %vm220, %v1273, %v1271
      %1276 = vrot.lane.b32.xlu0 %v1254, 111
      %v1277 = vpop.permute.xlu0 %1276
      %1278 = vrot.lane.b32.xlu0 %v1256, 111
      %v1279 = vpop.permute.xlu0 %1278
      %v1280 = vsel %vm227, %v1277, %v1279
      %v1281 = vsel %vm227, %v1279, %v1277
      %1282 = vrot.lane.b32.xlu0 %v1254, 110
      %v1283 = vpop.permute.xlu0 %1282
      %1284 = vrot.lane.b32.xlu0 %v1256, 110
      %v1285 = vpop.permute.xlu0 %1284
      %v1286 = vsel %vm234, %v1283, %v1285
      %v1287 = vsel %vm234, %v1285, %v1283
      %1288 = vrot.lane.b32.xlu0 %v1254, 96
      %v1289 = vpop.permute.xlu0 %1288
      %1290 = vrot.lane.b32.xlu0 %v1256, 96
      %v1291 = vpop.permute.xlu0 %1290
      %v1292 = vsel %vm241, %v1289, %v1291
      %v1293 = vsel %vm241, %v1291, %v1289
      %1294 = vrot.lane.b32.xlu0 %v1254, 95
      %v1295 = vpop.permute.xlu0 %1294
      %1296 = vrot.lane.b32.xlu0 %v1256, 95
      %v1297 = vpop.permute.xlu0 %1296
      %v1298 = vsel %vm248, %v1295, %v1297
      %v1299 = vsel %vm248, %v1297, %v1295
      %1300 = vrot.lane.b32.xlu0 %v1254, 94
      %v1301 = vpop.permute.xlu0 %1300
      %1302 = vrot.lane.b32.xlu0 %v1256, 94
      %v1303 = vpop.permute.xlu0 %1302
      %v1304 = vsel %vm255, %v1301, %v1303
      %v1305 = vsel %vm255, %v1303, %v1301
      %v1308 = vrot.slane %v1262, 4
      %v1309 = vrot.slane %v1263, 4
      %v1314 = vrot.slane %v1274, 4
      %v1315 = vrot.slane %v1275, 4
      %v1320 = vrot.slane %v1286, 4
      %v1321 = vrot.slane %v1287, 4
      %v1326 = vrot.slane %v1298, 4
      %v1327 = vrot.slane %v1299, 4
      %v1330 = vsel %vm282, %v1254, %v1308
      %v1331 = vsel %vm282, %v1256, %v1309
      %v1332 = vsel %vm282, %v1268, %v1314
      %v1333 = vsel %vm282, %v1269, %v1315
      %v1334 = vsel %vm282, %v1280, %v1320
      %v1335 = vsel %vm282, %v1281, %v1321
      %v1336 = vsel %vm282, %v1292, %v1326
      %v1337 = vsel %vm282, %v1293, %v1327
      %v1338 = vpack.c.bf16 %v1332, %v1330
      %v1339 = vpack.c.bf16 %v1333, %v1331
      %v1340 = vpack.c.bf16 %v1336, %v1334
      %v1341 = vpack.c.bf16 %v1337, %v1335
      %v1342 = vpack.c.bf16 %v1304, %v1304
      %v1343 = vpack.c.bf16 %v1305, %v1305
      %v1345 = vsel %vm301, %v1342, 0
      %v1348 = vsel %vm301, %v1343, 0
      %1350 = vmatprep.subr.bf16.mxu0 %v1339
      %1351 = vmatpush1.bf16.msra.mxu0 %v1338
      %1352 = vmatprep.subr.bf16.mxu0 %v1341
      %1353 = vmatpush1.bf16.msra.mxu0 %v1340
      %1354 = vmatprep.subr.bf16.mxu0 %v1348
      %1355 = vmatpush1.bf16.msra.mxu0 %v1345
      %1356 = vmatprep.subr.bf16.mxu0 0
      %1357 = vmatpush1.bf16.msra.mxu0 0
      %1358 = vmatprep.subr.bf16.mxu0 0
      %1359 = vmatpush1.bf16.msra.mxu0 0
      %1360 = vmatprep.subr.bf16.mxu0 0
      %1361 = vmatpush1.bf16.msra.mxu0 0
      %1362 = vmatprep.subr.bf16.mxu0 0
      %1363 = vmatpush1.bf16.msra.mxu0 0
      %1364 = vmatprep.subr.bf16.mxu0 0
      %1365 = vmatpush1.bf16.msra.mxu0 0
      %1366 = vmatprep.subr.bf16.mxu0 0
      %1367 = vmatpush1.bf16.msra.mxu0 0
      %1368 = vmatprep.subr.bf16.mxu0 0
      %1369 = vmatpush1.bf16.msra.mxu0 0
      %1370 = vmatprep.subr.bf16.mxu0 0
      %1371 = vmatpush1.bf16.msra.mxu0 0
      %1372 = vmatprep.subr.bf16.mxu0 0
      %1373 = vmatpush1.bf16.msra.mxu0 0
      %1374 = vmatprep.subr.bf16.mxu0 0
      %1375 = vmatpush1.bf16.msra.mxu0 0
      %1376 = vmatprep.subr.bf16.mxu0 0
      %1377 = vmatpush1.bf16.msra.mxu0 0
      %1378 = vmatprep.subr.bf16.mxu0 0
      %1379 = vmatpush1.bf16.msra.mxu0 0
      %1380 = vmatprep.subr.bf16.mxu0 0
      %1381 = vmatpush1.bf16.msra.mxu0 0
      %1382 = vmatprep.mubr.bf16.mxu0 0
      %1383 = vmatmul.mubr.bf16.gmra.mrb[0].mxu0 %v299
      %v1384 = vpop.f32.mrb[0].mxu0
      %v1385 = vadd.f32 0.0, %v1384
      %v1386 = vpop.f32.mrb[0].mxu0
      %v1387 = vadd.f32 0.0, %v1386
      %v1388 = vpop.f32.mrb[0].mxu0
      %v1389 = vpop.f32.mrb[0].mxu0
      %1390 = vdwg.mxu0
      %v1391 = vpack.c.bf16 %v1385, %v1385
      %v1392 = vpack.c.bf16 %v1387, %v1387
      %v1395 = vunpack.c.l.b16 %v1391
      %v1396 = vunpack.c.l.b16 %v1392
      %v1397 = vpack.c.b16 %v1396, %v1395
      %s1399 = scalar_lea.vmem %s190, 56
      %1400 = vst [vmem:[%s1399] sm:$0xff] %v1397
      %s1401 = sadd.s32 %s17, %s18
      %s1402 = smul.u32 8, %s1401
      %p1403 = scmp.lt.s32.totalorder %s1402, 15
      %s1404 = scalar_select %p1403, %s1402, 15
      %s1405 = smul.addr %s1404, 2
      %s1406 = smul.addr %s1405, 4
      %s1407 = scalar_lea.vmem %s2, %s1406
      // Predicated region
      $region29: #{forward.1} parent=27 // pred_check
        %p1408 = pneg %p99
      $region30: #{forward.1} parent=27 // pred_check_branch
        %1410 = sbr.rel (%p1408) target = $region32
      $region31: #{forward.1} parent=27 // pred_region
        %s1411 = sadd.s32 %s17, %s18
        %s1412 = smul.u32 8, %s1411
      $region32: #{forward.1} parent=27 // pred_fallthru
        _
    $region28: #{forward.1} parent=5 // pred_fallthru
      _
    %p1413 = scmp.le.s32.totalorder 2, %s8
    // Predicated region
    $region33: #{forward.1} parent=5 // pred_check
      %p1414 = pneg %p1413
    $region34: #{forward.1} parent=5 // pred_check_branch
      %1416 = sbr.rel (%p1414) target = $region36
    $region35: #{forward.1} parent=5 // pred_region
      %s1417 = ssub.s32 %s8, 2
      // Predicated region
      $region37: #{forward.1} parent=35 // pred_check
        %p1418 = pneg %p105
      $region38: #{forward.1} parent=35 // pred_check_branch
        %1420 = sbr.rel (%p1418) target = $region40
      $region39: #{forward.1} parent=35 // pred_region
        %s1421 = sadd.s32 %s19, %s20
        %s1422 = smul.u32 8, %s1421
        %p1423 = scmp.lt.s32.totalorder %s1422, 15
        %s1424 = scalar_select %p1423, %s1422, 15
        %s1425 = smul.addr %s1424, 2
        %s1426 = smul.addr %s1425, 4
        %s1427 = scalar_lea.vmem %s2, %s1426
      $region40: #{forward.1} parent=35 // pred_fallthru
        _
    $region36: #{forward.1} parent=5 // pred_fallthru
      _
  $region6: #{forward.1} parent=0 // loop_footer
    %s12 = sadd.s32 1, %s8
  $region7: #{forward.1} parent=0 // loop_footer_branch
    %7 = sbr.rel target = $region3
  $region8: #{forward.1} parent=0 // loop_exit
    _

</llo_original>
